<compile_context>
chip_gen: v7x
topology: tpu7x:2x2x1
jax: 0.10.0
libtpu: 0.0.40
codegen_flags: <defaults>
</compile_context>

<pallas_src>
import math
import jax
import jax.numpy as jnp
from jax.experimental import pallas as pl
from jax.experimental.pallas import tpu as pltpu

DROP_P = 0.7


def _attn_dropout_kernel(q_ref, k_ref, v_ref, u_ref, o_ref):
    # q_ref/k_ref/v_ref: (BH, S, D) in VMEM; u_ref: (BH, S, S) uniform [0,1);
    # o_ref: (BH, S*D) lane-dense output slab.
    q = q_ref[...]                      # (BH, S, D)
    k = k_ref[...]                      # (BH, S, D)
    v = v_ref[...]                      # (BH, S, D)
    u = u_ref[...]                      # (BH, S, S)

    BH, S, D = q.shape
    scale = 1.0 / math.sqrt(D)

    # Scaled scores: batched contraction over D, K consumed directly (no .T).
    s = jnp.einsum("bqd,bkd->bqk", q, k,
                   preferred_element_type=jnp.float32) * scale        # (BH,S,S)

    # Numerically stable softmax with the normalization fused into the
    # inverted-dropout scale: inv = (1/(1-p)) / sum(exp).
    m = jnp.max(s, axis=-1, keepdims=True)
    p = jnp.exp(s - m)
    l = jnp.sum(p, axis=-1, keepdims=True)
    inv = (1.0 / (1.0 - DROP_P)) / l                                   # (BH,S,1)

    # Inverted dropout: keep with prob 1-p = 0.3.
    keep = u >= jnp.float32(DROP_P)
    dropped = jnp.where(keep, p * inv, jnp.zeros_like(p))              # (BH,S,S)

    out = jnp.einsum("bqk,bkd->bqd", dropped.astype(v.dtype), v,
                     preferred_element_type=jnp.float32)               # (BH,S,D)

    # Lane-dense store: (BH, S, D) -> (BH, S*D), last dim = 256 (2 x 128 lanes).
    o_ref[...] = out.reshape(BH, S * D).astype(o_ref.dtype)


def sdpa_dropout(q, k, v, mask, *, seed=0):
    """q, k, v: [B, H, S, D] float32.  mask is unused (matches the PyTorch model)."""
    del mask  # unused in the reference forward()
    B, H, S, D = q.shape
    BH = B * H

    qf = q.reshape(BH, S, D)
    kf = k.reshape(BH, S, D)
    vf = v.reshape(BH, S, D)

    # Host-side uniform draw for the dropout mask (single bulk draw for all heads).
    key = jax.random.PRNGKey(seed)
    u = jax.random.uniform(key, (BH, S, S), dtype=jnp.float32)

    vmem_spec = pl.BlockSpec(memory_space=pltpu.MemorySpace.VMEM)

    out_flat = pl.pallas_call(
        _attn_dropout_kernel,
        out_shape=jax.ShapeDtypeStruct((BH, S * D), q.dtype),
        in_specs=[vmem_spec, vmem_spec, vmem_spec, vmem_spec],
        out_specs=vmem_spec,
    )(qf, kf, vf, u)

    return out_flat.reshape(B, H, S, D)


if __name__ == "__main__":
    key = jax.random.PRNGKey(0)
    kq, kk, kv, kw, kb = jax.random.split(key, 5)

    B, H, S, D = 2, 4, 8, 32
    q = jax.random.normal(kq, (B, H, S, D), dtype=jnp.float32)
    k = jax.random.normal(kk, (B, H, S, D), dtype=jnp.float32)
    v = jax.random.normal(kv, (B, H, S, D), dtype=jnp.float32)
    mask = jnp.zeros((B, H, S, S), dtype=jnp.float32)  # unused, per reference

    # Deterministic init of the (unused) Linear(32, 32) parameters for fidelity.
    qk_mat_w = jax.random.normal(kw, (32, 32), dtype=jnp.float32) * (1.0 / math.sqrt(32))
    qk_mat_b = jax.random.normal(kb, (32,), dtype=jnp.float32) * (1.0 / math.sqrt(32))
    # TODO(synk): self.qk_mat is never applied in the reference forward(); kept only as params.

    out = sdpa_dropout(q, k, v, mask, seed=0)
    jax.block_until_ready(out)
    assert out.shape == (B, H, S, D)
    print("KERNEL_OK")
</pallas_src>

<mosaic_0001>
module attributes {stable_mosaic.version = 11 : i64} {
  func.func @_attn_dropout_kernel(%arg0: memref<8x8x32xf32, #tpu.memory_space<vmem>>, %arg1: memref<8x8x32xf32, #tpu.memory_space<vmem>>, %arg2: memref<8x8x32xf32, #tpu.memory_space<vmem>>, %arg3: memref<8x8x8xf32, #tpu.memory_space<vmem>>, %arg4: memref<8x256xf32, #tpu.memory_space<vmem>>) attributes {dimension_semantics = [], scalar_prefetch = 0 : i64, scratch_operands = 0 : i64, tpu.core_type = #tpu.core_type<tc>} {
    %c0 = arith.constant 0 : index
    %c0_0 = arith.constant 0 : index
    %c0_1 = arith.constant 0 : index
    %0 = vector.load %arg0[%c0, %c0_0, %c0_1] : memref<8x8x32xf32, #tpu.memory_space<vmem>>, vector<8x8x32xf32>
    %c0_2 = arith.constant 0 : index
    %c0_3 = arith.constant 0 : index
    %c0_4 = arith.constant 0 : index
    %1 = vector.load %arg1[%c0_2, %c0_3, %c0_4] : memref<8x8x32xf32, #tpu.memory_space<vmem>>, vector<8x8x32xf32>
    %c0_5 = arith.constant 0 : index
    %c0_6 = arith.constant 0 : index
    %c0_7 = arith.constant 0 : index
    %2 = vector.load %arg2[%c0_5, %c0_6, %c0_7] : memref<8x8x32xf32, #tpu.memory_space<vmem>>, vector<8x8x32xf32>
    %c0_8 = arith.constant 0 : index
    %c0_9 = arith.constant 0 : index
    %c0_10 = arith.constant 0 : index
    %3 = vector.load %arg3[%c0_8, %c0_9, %c0_10] : memref<8x8x8xf32, #tpu.memory_space<vmem>>, vector<8x8x8xf32>
    "tpu.trace_start"() <{level = 10 : i32, message = "bqd,bkd->bqk"}> : () -> ()
    %cst = arith.constant dense<0.000000e+00> : vector<8x8x8xf32>
    %4 = tpu.matmul %0, %1, %cst {dimension_numbers = #tpu.dot_dimension_numbers<[2], [2], [1], [1], [0, 0, 0, 1, 1, 1], [0], [0]>} : vector<8x8x32xf32>, vector<8x8x32xf32>, vector<8x8x8xf32> -> vector<8x8x8xf32>
    "tpu.trace_stop"() : () -> ()
    %cst_11 = arith.constant 0.176776692 : f32
    %5 = vector.broadcast %cst_11 : f32 to vector<8x8x8xf32>
    %6 = arith.mulf %4, %5 : vector<8x8x8xf32>
    %cst_12 = arith.constant dense<0xFF800000> : vector<8x8xf32>
    %7 = vector.multi_reduction <maximumf>, %6, %cst_12 [2] : vector<8x8x8xf32> to vector<8x8xf32>
    %8 = vector.shape_cast %7 : vector<8x8xf32> to vector<8x8x1xf32>
    %9 = vector.broadcast %8 : vector<8x8x1xf32> to vector<8x8x8xf32>
    %10 = arith.subf %6, %9 : vector<8x8x8xf32>
    %11 = math.exp %10 : vector<8x8x8xf32>
    %cst_13 = arith.constant dense<0.000000e+00> : vector<8x8xf32>
    %12 = vector.multi_reduction <add>, %11, %cst_13 [2] : vector<8x8x8xf32> to vector<8x8xf32>
    %13 = vector.shape_cast %12 : vector<8x8xf32> to vector<8x8x1xf32>
    %cst_14 = arith.constant 3.33333325 : f32
    %14 = vector.broadcast %cst_14 : f32 to vector<8x8x1xf32>
    %15 = arith.divf %14, %13 : vector<8x8x1xf32>
    %cst_15 = arith.constant 0.699999988 : f32
    %16 = vector.broadcast %cst_15 : f32 to vector<8x8x8xf32>
    %17 = arith.cmpf oge, %3, %16 : vector<8x8x8xf32>
    %18 = vector.broadcast %15 : vector<8x8x1xf32> to vector<8x8x8xf32>
    %19 = arith.mulf %11, %18 : vector<8x8x8xf32>
    %cst_16 = arith.constant 0.000000e+00 : f32
    %20 = vector.broadcast %cst_16 : f32 to vector<8x8x8xf32>
    %21 = arith.select %17, %19, %20 : vector<8x8x8xi1>, vector<8x8x8xf32>
    "tpu.trace_start"() <{level = 10 : i32, message = "bqk,bkd->bqd"}> : () -> ()
    %cst_17 = arith.constant dense<0.000000e+00> : vector<8x8x32xf32>
    %22 = tpu.matmul %21, %2, %cst_17 {dimension_numbers = #tpu.dot_dimension_numbers<[2], [1], [1], [2], [0, 0, 0, 1, 1, 2], [0], [0]>} : vector<8x8x8xf32>, vector<8x8x32xf32>, vector<8x8x32xf32> -> vector<8x8x32xf32>
    "tpu.trace_stop"() : () -> ()
    %23 = vector.shape_cast %22 : vector<8x8x32xf32> to vector<8x256xf32>
    %c0_18 = arith.constant 0 : index
    %c0_19 = arith.constant 0 : index
    %24 = vector.load %arg4[%c0_18, %c0_19] : memref<8x256xf32, #tpu.memory_space<vmem>>, vector<8x256xf32>
    tpu.vector_store %arg4[%c0_18, %c0_19], %23 {strides = array<i32>} : memref<8x256xf32, #tpu.memory_space<vmem>>, vector<8x256xf32>,
    return
  }
}

</mosaic_0001>

<llo_original>
// kernel: tpu_custom_call.1
$region0: #{tpu_custom_call.1}
  #allocation0 [shape = 'u32[]', space=smem, size = 0x4, offset = 0x4, fixed_abs, tag = 'smem constant byte address 0x4 - core index']
  #allocation1 [shape = 'u32[144,128]{1,0:T(1,128)}', space=vmem, size = 0x12000, scoped, tag = 'internal scratch']
  %s0 = inlined_call_operand.hbm [shape: f32[8,8,32], index: 0, kind: input, shape index: {}]
  %s1 = inlined_call_operand.hbm [shape: f32[8,8,32], index: 1, kind: input, shape index: {}]
  %s2 = inlined_call_operand.hbm [shape: f32[8,8,32], index: 2, kind: input, shape index: {}]
  %s3 = inlined_call_operand.hbm [shape: f32[8,8,8], index: 3, kind: input, shape index: {}]
  %s4 = inlined_call_operand.hbm [shape: f32[8,256], index: 4, kind: output, shape index: {}]
  %s5 = sld [smem:[#allocation0]]
  $region42: #{tpu_custom_call.1} parent=0
    _
  %s7 = ssub.s32 1, %s5
  %s8 = scalar_select 0, %s7, %s5
  $region1: #{tpu_custom_call.1} parent=0
    #allocation2 [shape = 'u8[32768]{0}', space=vmem, size = 0x8000, scoped, tag = 'input window, operand 0, single buffered']
    #allocation3 [shape = 's32[1]{0}', space=sflag, size = 0x4, scoped, tag = 'scoped memory for tpu_custom_call.1']
    #allocation4 [shape = 's32[1]{0}', space=sflag, size = 0x4, scoped, tag = 'scoped memory for tpu_custom_call.1']
    #allocation5 [shape = 'u8[32768]{0}', space=vmem, size = 0x8000, scoped, tag = 'input window, operand 1, single buffered']
    #allocation6 [shape = 's32[1]{0}', space=sflag, size = 0x4, scoped, tag = 'scoped memory for tpu_custom_call.1']
    #allocation7 [shape = 'u8[32768]{0}', space=vmem, size = 0x8000, scoped, tag = 'input window, operand 2, single buffered']
    #allocation8 [shape = 'u8[32768]{0}', space=vmem, size = 0x8000, scoped, tag = 'input window, operand 3, single buffered']
    #allocation9 [shape = 's32[1]{0}', space=sflag, size = 0x4, scoped, tag = 'scoped memory for tpu_custom_call.1']
    #allocation10 [shape = 'u8[8192]{0}', space=vmem, size = 0x2000, scoped, tag = 'output window, operand 0, single buffered']
    %9 = vsyncpa [#allocation3], 0
    %10 = vsyncpa [#allocation6], 0
    %11 = vsyncpa [#allocation9], 0
    %12 = vsyncpa [#allocation4], 0
    // Predicated region
    $region2: #{tpu_custom_call.1} parent=1 // pred_check
      _
    $region3: #{tpu_custom_call.1} parent=1 // pred_check_branch
      %14 = sbr.rel (0) target = $region5
    $region4: #{tpu_custom_call.1} parent=1 // pred_region
      %s16 = ssub.s32 1024, 1024
      %17 = vsyncadd [#allocation3], %s16
      %s18 = sshll.u32 [#allocation2], 4
      %s19 = int_to_ptr.vmem [resolvable:$true] %s18
      %24 = dma.hbm_to_vmem [thread:$0]  %s0, 1024, %s19, [#allocation3], 128, 128, 8
    $region5: #{tpu_custom_call.1} parent=1 // pred_fallthru
      _
    // Predicated region
    $region6: #{tpu_custom_call.1} parent=1 // pred_check
      _
    $region7: #{tpu_custom_call.1} parent=1 // pred_check_branch
      %26 = sbr.rel (0) target = $region9
    $region8: #{tpu_custom_call.1} parent=1 // pred_region
      %s28 = ssub.s32 1024, 1024
      %29 = vsyncadd [#allocation6], %s28
      %s30 = sshll.u32 [#allocation5], 4
      %s31 = int_to_ptr.vmem [resolvable:$true] %s30
      %36 = dma.hbm_to_vmem [thread:$0]  %s1, 1024, %s31, [#allocation6], 128, 128, 8
    $region9: #{tpu_custom_call.1} parent=1 // pred_fallthru
      _
    // Predicated region
    $region10: #{tpu_custom_call.1} parent=1 // pred_check
      _
    $region11: #{tpu_custom_call.1} parent=1 // pred_check_branch
      %38 = sbr.rel (0) target = $region13
    $region12: #{tpu_custom_call.1} parent=1 // pred_region
      %s40 = ssub.s32 1024, 1024
      %41 = vsyncadd [#allocation6], %s40
      %s42 = sshll.u32 [#allocation7], 4
      %s43 = int_to_ptr.vmem [resolvable:$true] %s42
      %48 = dma.hbm_to_vmem [thread:$0]  %s2, 1024, %s43, [#allocation6], 128, 128, 8
    $region13: #{tpu_custom_call.1} parent=1 // pred_fallthru
      _
    // Predicated region
    $region14: #{tpu_custom_call.1} parent=1 // pred_check
      _
    $region15: #{tpu_custom_call.1} parent=1 // pred_check_branch
      %50 = sbr.rel (0) target = $region17
    $region16: #{tpu_custom_call.1} parent=1 // pred_region
      %s52 = ssub.s32 1024, 1024
      %53 = vsyncadd [#allocation9], %s52
      %s54 = sshll.u32 [#allocation8], 4
      %s55 = int_to_ptr.vmem [resolvable:$true] %s54
      %60 = dma.hbm_to_vmem [thread:$0]  %s3, 1024, %s55, [#allocation9], 128, 128, 8
    $region17: #{tpu_custom_call.1} parent=1 // pred_fallthru
      _
    // Predicated region
    $region18: #{tpu_custom_call.1} parent=1 // pred_check
      _
    $region19: #{tpu_custom_call.1} parent=1 // pred_check_branch
      %62 = sbr.rel (0) target = $region21
    $region20: #{tpu_custom_call.1} parent=1 // pred_region
      %63 = dma.done [#allocation3], 1024
    $region21: #{tpu_custom_call.1} parent=1 // pred_fallthru
      _
    // Predicated region
    $region22: #{tpu_custom_call.1} parent=1 // pred_check
      _
    $region23: #{tpu_custom_call.1} parent=1 // pred_check_branch
      %65 = sbr.rel (0) target = $region25
    $region24: #{tpu_custom_call.1} parent=1 // pred_region
      %66 = dma.done [#allocation6], 1024
    $region25: #{tpu_custom_call.1} parent=1 // pred_fallthru
      _
    // Predicated region
    $region26: #{tpu_custom_call.1} parent=1 // pred_check
      _
    $region27: #{tpu_custom_call.1} parent=1 // pred_check_branch
      %68 = sbr.rel (0) target = $region29
    $region28: #{tpu_custom_call.1} parent=1 // pred_region
      %69 = dma.done [#allocation6], 1024
    $region29: #{tpu_custom_call.1} parent=1 // pred_fallthru
      _
    // Predicated region
    $region30: #{tpu_custom_call.1} parent=1 // pred_check
      _
    $region31: #{tpu_custom_call.1} parent=1 // pred_check_branch
      %71 = sbr.rel (0) target = $region33
    $region32: #{tpu_custom_call.1} parent=1 // pred_region
      %72 = dma.done [#allocation9], 1024
    $region33: #{tpu_custom_call.1} parent=1 // pred_fallthru
      _
    %v73 = vld [vmem:[#allocation2] sm:$0xff]
    %v74 = vld [vmem:[#allocation2 + $0x8] sm:$0xff]
    %v75 = vld [vmem:[#allocation2 + $0x10] sm:$0xff]
    %v76 = vld [vmem:[#allocation2 + $0x18] sm:$0xff]
    %v77 = vld [vmem:[#allocation2 + $0x20] sm:$0xff]
    %v78 = vld [vmem:[#allocation2 + $0x28] sm:$0xff]
    %v79 = vld [vmem:[#allocation2 + $0x30] sm:$0xff]
    %v80 = vld [vmem:[#allocation2 + $0x38] sm:$0xff]
    %v81 = vld [vmem:[#allocation5] sm:$0xff]
    %v82 = vld [vmem:[#allocation5 + $0x8] sm:$0xff]
    %v83 = vld [vmem:[#allocation5 + $0x10] sm:$0xff]
    %v84 = vld [vmem:[#allocation5 + $0x18] sm:$0xff]
    %v85 = vld [vmem:[#allocation5 + $0x20] sm:$0xff]
    %v86 = vld [vmem:[#allocation5 + $0x28] sm:$0xff]
    %v87 = vld [vmem:[#allocation5 + $0x30] sm:$0xff]
    %v88 = vld [vmem:[#allocation5 + $0x38] sm:$0xff]
    %v89 = vld [vmem:[#allocation7] sm:$0xff]
    %v90 = vld [vmem:[#allocation7 + $0x8] sm:$0xff]
    %v91 = vld [vmem:[#allocation7 + $0x10] sm:$0xff]
    %v92 = vld [vmem:[#allocation7 + $0x18] sm:$0xff]
    %v93 = vld [vmem:[#allocation7 + $0x20] sm:$0xff]
    %v94 = vld [vmem:[#allocation7 + $0x28] sm:$0xff]
    %v95 = vld [vmem:[#allocation7 + $0x30] sm:$0xff]
    %v96 = vld [vmem:[#allocation7 + $0x38] sm:$0xff]
    %v97 = vld [vmem:[#allocation8] sm:$0xff]
    %v98 = vld [vmem:[#allocation8 + $0x8] sm:$0xff]
    %v99 = vld [vmem:[#allocation8 + $0x10] sm:$0xff]
    %v100 = vld [vmem:[#allocation8 + $0x18] sm:$0xff]
    %v101 = vld [vmem:[#allocation8 + $0x20] sm:$0xff]
    %v102 = vld [vmem:[#allocation8 + $0x28] sm:$0xff]
    %v103 = vld [vmem:[#allocation8 + $0x30] sm:$0xff]
    %v104 = vld [vmem:[#allocation8 + $0x38] sm:$0xff]
    %vm105 = vcmask 261120
    %v107 = vsel %vm105, %v73, 0
    %v110 = vsel %vm105, %v81, 0
    %112 = vmatprep.subr.mxu0 0.0
    %113 = vmatpush1.xpose.msra.mxu0 %v110
    %114 = vmatprep.subr.mxu0 0.0
    %115 = vmatpush1.xpose.msra.mxu0 0.0
    %116 = vmatprep.subr.mxu0 0.0
    %117 = vmatpush1.xpose.msra.mxu0 0.0
    %118 = vmatprep.subr.mxu0 0.0
    %119 = vmatpush1.xpose.msra.mxu0 0.0
    %120 = vmatprep.subr.mxu0 0.0
    %121 = vmatpush1.xpose.msra.mxu0 0.0
    %122 = vmatprep.subr.mxu0 0.0
    %123 = vmatpush1.xpose.msra.mxu0 0.0
    %124 = vmatprep.subr.mxu0 0.0
    %125 = vmatpush1.xpose.msra.mxu0 0.0
    %126 = vmatprep.subr.mxu0 0.0
    %127 = vmatpush1.xpose.msra.mxu0 0.0
    %128 = vmatprep.subr.mxu0 0.0
    %129 = vmatpush1.xpose.msra.mxu0 0.0
    %130 = vmatprep.subr.mxu0 0.0
    %131 = vmatpush1.xpose.msra.mxu0 0.0
    %132 = vmatprep.subr.mxu0 0.0
    %133 = vmatpush1.xpose.msra.mxu0 0.0
    %134 = vmatprep.subr.mxu0 0.0
    %135 = vmatpush1.xpose.msra.mxu0 0.0
    %136 = vmatprep.subr.mxu0 0.0
    %137 = vmatpush1.xpose.msra.mxu0 0.0
    %138 = vmatprep.subr.mxu0 0.0
    %139 = vmatpush1.xpose.msra.mxu0 0.0
    %140 = vmatprep.subr.mxu0 0.0
    %141 = vmatpush1.xpose.msra.mxu0 0.0
    %142 = vmatprep.subr.mxu0 0.0
    %143 = vmatpush1.xpose.msra.mxu0 0.0
    %144 = vmatprep.subr.mxu0 0.0
    %145 = vmatpush1.xpose.msra.mxu0 0.0
    %146 = vmatprep.subr.mxu0 0.0
    %147 = vmatpush1.xpose.msra.mxu0 0.0
    %148 = vmatprep.subr.mxu0 0.0
    %149 = vmatpush1.xpose.msra.mxu0 0.0
    %150 = vmatprep.subr.mxu0 0.0
    %151 = vmatpush1.xpose.msra.mxu0 0.0
    %152 = vmatprep.subr.mxu0 0.0
    %153 = vmatpush1.xpose.msra.mxu0 0.0
    %154 = vmatprep.subr.mxu0 0.0
    %155 = vmatpush1.xpose.msra.mxu0 0.0
    %156 = vmatprep.subr.mxu0 0.0
    %157 = vmatpush1.xpose.msra.mxu0 0.0
    %158 = vmatprep.subr.mxu0 0.0
    %159 = vmatpush1.xpose.msra.mxu0 0.0
    %160 = vmatprep.subr.mxu0 0.0
    %161 = vmatpush1.xpose.msra.mxu0 0.0
    %162 = vmatprep.subr.mxu0 0.0
    %163 = vmatpush1.xpose.msra.mxu0 0.0
    %164 = vmatprep.subr.mxu0 0.0
    %165 = vmatpush1.xpose.msra.mxu0 0.0
    %166 = vmatprep.subr.mxu0 0.0
    %167 = vmatpush1.xpose.msra.mxu0 0.0
    %168 = vmatprep.subr.mxu0 0.0
    %169 = vmatpush1.xpose.msra.mxu0 0.0
    %170 = vmatprep.subr.mxu0 0.0
    %171 = vmatpush1.xpose.msra.mxu0 0.0
    %172 = vmatprep.subr.mxu0 0.0
    %173 = vmatpush1.xpose.msra.mxu0 0.0
    %174 = vmatprep.subr.mxu0 0.0
    %175 = vmatpush1.xpose.msra.mxu0 0.0
    %176 = vmatprep.mubr.f32.mxu0 0.0
    %177 = vmatmul.mubr.f32.gmra.mrb[0].mxu0 %v107
    %v178 = vpop.f32.mrb[0].mxu0
    %v179 = vadd.f32 0.0, %v178
    %v180 = vpop.f32.mrb[0].mxu0
    %181 = vdwg.mxu0
    %v183 = vsel %vm105, %v74, 0
    %v186 = vsel %vm105, %v82, 0
    %188 = vmatprep.subr.mxu0 0.0
    %189 = vmatpush1.xpose.msra.mxu0 %v186
    %190 = vmatprep.subr.mxu0 0.0
    %191 = vmatpush1.xpose.msra.mxu0 0.0
    %192 = vmatprep.subr.mxu0 0.0
    %193 = vmatpush1.xpose.msra.mxu0 0.0
    %194 = vmatprep.subr.mxu0 0.0
    %195 = vmatpush1.xpose.msra.mxu0 0.0
    %196 = vmatprep.subr.mxu0 0.0
    %197 = vmatpush1.xpose.msra.mxu0 0.0
    %198 = vmatprep.subr.mxu0 0.0
    %199 = vmatpush1.xpose.msra.mxu0 0.0
    %200 = vmatprep.subr.mxu0 0.0
    %201 = vmatpush1.xpose.msra.mxu0 0.0
    %202 = vmatprep.subr.mxu0 0.0
    %203 = vmatpush1.xpose.msra.mxu0 0.0
    %204 = vmatprep.subr.mxu0 0.0
    %205 = vmatpush1.xpose.msra.mxu0 0.0
    %206 = vmatprep.subr.mxu0 0.0
    %207 = vmatpush1.xpose.msra.mxu0 0.0
    %208 = vmatprep.subr.mxu0 0.0
    %209 = vmatpush1.xpose.msra.mxu0 0.0
    %210 = vmatprep.subr.mxu0 0.0
    %211 = vmatpush1.xpose.msra.mxu0 0.0
    %212 = vmatprep.subr.mxu0 0.0
    %213 = vmatpush1.xpose.msra.mxu0 0.0
    %214 = vmatprep.subr.mxu0 0.0
    %215 = vmatpush1.xpose.msra.mxu0 0.0
    %216 = vmatprep.subr.mxu0 0.0
    %217 = vmatpush1.xpose.msra.mxu0 0.0
    %218 = vmatprep.subr.mxu0 0.0
    %219 = vmatpush1.xpose.msra.mxu0 0.0
    %220 = vmatprep.subr.mxu0 0.0
    %221 = vmatpush1.xpose.msra.mxu0 0.0
    %222 = vmatprep.subr.mxu0 0.0
    %223 = vmatpush1.xpose.msra.mxu0 0.0
    %224 = vmatprep.subr.mxu0 0.0
    %225 = vmatpush1.xpose.msra.mxu0 0.0
    %226 = vmatprep.subr.mxu0 0.0
    %227 = vmatpush1.xpose.msra.mxu0 0.0
    %228 = vmatprep.subr.mxu0 0.0
    %229 = vmatpush1.xpose.msra.mxu0 0.0
    %230 = vmatprep.subr.mxu0 0.0
    %231 = vmatpush1.xpose.msra.mxu0 0.0
    %232 = vmatprep.subr.mxu0 0.0
    %233 = vmatpush1.xpose.msra.mxu0 0.0
    %234 = vmatprep.subr.mxu0 0.0
    %235 = vmatpush1.xpose.msra.mxu0 0.0
    %236 = vmatprep.subr.mxu0 0.0
    %237 = vmatpush1.xpose.msra.mxu0 0.0
    %238 = vmatprep.subr.mxu0 0.0
    %239 = vmatpush1.xpose.msra.mxu0 0.0
    %240 = vmatprep.subr.mxu0 0.0
    %241 = vmatpush1.xpose.msra.mxu0 0.0
    %242 = vmatprep.subr.mxu0 0.0
    %243 = vmatpush1.xpose.msra.mxu0 0.0
    %244 = vmatprep.subr.mxu0 0.0
    %245 = vmatpush1.xpose.msra.mxu0 0.0
    %246 = vmatprep.subr.mxu0 0.0
    %247 = vmatpush1.xpose.msra.mxu0 0.0
    %248 = vmatprep.subr.mxu0 0.0
    %249 = vmatpush1.xpose.msra.mxu0 0.0
    %250 = vmatprep.subr.mxu0 0.0
    %251 = vmatpush1.xpose.msra.mxu0 0.0
    %252 = vmatprep.mubr.f32.mxu0 0.0
    %253 = vmatmul.mubr.f32.gmra.mrb[0].mxu0 %v183
    %v254 = vpop.f32.mrb[0].mxu0
    %v255 = vadd.f32 0.0, %v254
    %v256 = vpop.f32.mrb[0].mxu0
    %257 = vdwg.mxu0
    %v259 = vsel %vm105, %v75, 0
    %v262 = vsel %vm105, %v83, 0
    %264 = vmatprep.subr.mxu0 0.0
    %265 = vmatpush1.xpose.msra.mxu0 %v262
    %266 = vmatprep.subr.mxu0 0.0
    %267 = vmatpush1.xpose.msra.mxu0 0.0
    %268 = vmatprep.subr.mxu0 0.0
    %269 = vmatpush1.xpose.msra.mxu0 0.0
    %270 = vmatprep.subr.mxu0 0.0
    %271 = vmatpush1.xpose.msra.mxu0 0.0
    %272 = vmatprep.subr.mxu0 0.0
    %273 = vmatpush1.xpose.msra.mxu0 0.0
    %274 = vmatprep.subr.mxu0 0.0
    %275 = vmatpush1.xpose.msra.mxu0 0.0
    %276 = vmatprep.subr.mxu0 0.0
    %277 = vmatpush1.xpose.msra.mxu0 0.0
    %278 = vmatprep.subr.mxu0 0.0
    %279 = vmatpush1.xpose.msra.mxu0 0.0
    %280 = vmatprep.subr.mxu0 0.0
    %281 = vmatpush1.xpose.msra.mxu0 0.0
    %282 = vmatprep.subr.mxu0 0.0
    %283 = vmatpush1.xpose.msra.mxu0 0.0
    %284 = vmatprep.subr.mxu0 0.0
    %285 = vmatpush1.xpose.msra.mxu0 0.0
    %286 = vmatprep.subr.mxu0 0.0
    %287 = vmatpush1.xpose.msra.mxu0 0.0
    %288 = vmatprep.subr.mxu0 0.0
    %289 = vmatpush1.xpose.msra.mxu0 0.0
    %290 = vmatprep.subr.mxu0 0.0
    %291 = vmatpush1.xpose.msra.mxu0 0.0
    %292 = vmatprep.subr.mxu0 0.0
    %293 = vmatpush1.xpose.msra.mxu0 0.0
    %294 = vmatprep.subr.mxu0 0.0
    %295 = vmatpush1.xpose.msra.mxu0 0.0
    %296 = vmatprep.subr.mxu0 0.0
    %297 = vmatpush1.xpose.msra.mxu0 0.0
    %298 = vmatprep.subr.mxu0 0.0
    %299 = vmatpush1.xpose.msra.mxu0 0.0
    %300 = vmatprep.subr.mxu0 0.0
    %301 = vmatpush1.xpose.msra.mxu0 0.0
    %302 = vmatprep.subr.mxu0 0.0
    %303 = vmatpush1.xpose.msra.mxu0 0.0
    %304 = vmatprep.subr.mxu0 0.0
    %305 = vmatpush1.xpose.msra.mxu0 0.0
    %306 = vmatprep.subr.mxu0 0.0
    %307 = vmatpush1.xpose.msra.mxu0 0.0
    %308 = vmatprep.subr.mxu0 0.0
    %309 = vmatpush1.xpose.msra.mxu0 0.0
    %310 = vmatprep.subr.mxu0 0.0
    %311 = vmatpush1.xpose.msra.mxu0 0.0
    %312 = vmatprep.subr.mxu0 0.0
    %313 = vmatpush1.xpose.msra.mxu0 0.0
    %314 = vmatprep.subr.mxu0 0.0
    %315 = vmatpush1.xpose.msra.mxu0 0.0
    %316 = vmatprep.subr.mxu0 0.0
    %317 = vmatpush1.xpose.msra.mxu0 0.0
    %318 = vmatprep.subr.mxu0 0.0
    %319 = vmatpush1.xpose.msra.mxu0 0.0
    %320 = vmatprep.subr.mxu0 0.0
    %321 = vmatpush1.xpose.msra.mxu0 0.0
    %322 = vmatprep.subr.mxu0 0.0
    %323 = vmatpush1.xpose.msra.mxu0 0.0
    %324 = vmatprep.subr.mxu0 0.0
    %325 = vmatpush1.xpose.msra.mxu0 0.0
    %326 = vmatprep.subr.mxu0 0.0
    %327 = vmatpush1.xpose.msra.mxu0 0.0
    %328 = vmatprep.mubr.f32.mxu0 0.0
    %329 = vmatmul.mubr.f32.gmra.mrb[0].mxu0 %v259
    %v330 = vpop.f32.mrb[0].mxu0
    %v331 = vadd.f32 0.0, %v330
    %v332 = vpop.f32.mrb[0].mxu0
    %333 = vdwg.mxu0
    %v335 = vsel %vm105, %v76, 0
    %v338 = vsel %vm105, %v84, 0
    %340 = vmatprep.subr.mxu0 0.0
    %341 = vmatpush1.xpose.msra.mxu0 %v338
    %342 = vmatprep.subr.mxu0 0.0
    %343 = vmatpush1.xpose.msra.mxu0 0.0
    %344 = vmatprep.subr.mxu0 0.0
    %345 = vmatpush1.xpose.msra.mxu0 0.0
    %346 = vmatprep.subr.mxu0 0.0
    %347 = vmatpush1.xpose.msra.mxu0 0.0
    %348 = vmatprep.subr.mxu0 0.0
    %349 = vmatpush1.xpose.msra.mxu0 0.0
    %350 = vmatprep.subr.mxu0 0.0
    %351 = vmatpush1.xpose.msra.mxu0 0.0
    %352 = vmatprep.subr.mxu0 0.0
    %353 = vmatpush1.xpose.msra.mxu0 0.0
    %354 = vmatprep.subr.mxu0 0.0
    %355 = vmatpush1.xpose.msra.mxu0 0.0
    %356 = vmatprep.subr.mxu0 0.0
    %357 = vmatpush1.xpose.msra.mxu0 0.0
    %358 = vmatprep.subr.mxu0 0.0
    %359 = vmatpush1.xpose.msra.mxu0 0.0
    %360 = vmatprep.subr.mxu0 0.0
    %361 = vmatpush1.xpose.msra.mxu0 0.0
    %362 = vmatprep.subr.mxu0 0.0
    %363 = vmatpush1.xpose.msra.mxu0 0.0
    %364 = vmatprep.subr.mxu0 0.0
    %365 = vmatpush1.xpose.msra.mxu0 0.0
    %366 = vmatprep.subr.mxu0 0.0
    %367 = vmatpush1.xpose.msra.mxu0 0.0
    %368 = vmatprep.subr.mxu0 0.0
    %369 = vmatpush1.xpose.msra.mxu0 0.0
    %370 = vmatprep.subr.mxu0 0.0
    %371 = vmatpush1.xpose.msra.mxu0 0.0
    %372 = vmatprep.subr.mxu0 0.0
    %373 = vmatpush1.xpose.msra.mxu0 0.0
    %374 = vmatprep.subr.mxu0 0.0
    %375 = vmatpush1.xpose.msra.mxu0 0.0
    %376 = vmatprep.subr.mxu0 0.0
    %377 = vmatpush1.xpose.msra.mxu0 0.0
    %378 = vmatprep.subr.mxu0 0.0
    %379 = vmatpush1.xpose.msra.mxu0 0.0
    %380 = vmatprep.subr.mxu0 0.0
    %381 = vmatpush1.xpose.msra.mxu0 0.0
    %382 = vmatprep.subr.mxu0 0.0
    %383 = vmatpush1.xpose.msra.mxu0 0.0
    %384 = vmatprep.subr.mxu0 0.0
    %385 = vmatpush1.xpose.msra.mxu0 0.0
    %386 = vmatprep.subr.mxu0 0.0
    %387 = vmatpush1.xpose.msra.mxu0 0.0
    %388 = vmatprep.subr.mxu0 0.0
    %389 = vmatpush1.xpose.msra.mxu0 0.0
    %390 = vmatprep.subr.mxu0 0.0
    %391 = vmatpush1.xpose.msra.mxu0 0.0
    %392 = vmatprep.subr.mxu0 0.0
    %393 = vmatpush1.xpose.msra.mxu0 0.0
    %394 = vmatprep.subr.mxu0 0.0
    %395 = vmatpush1.xpose.msra.mxu0 0.0
    %396 = vmatprep.subr.mxu0 0.0
    %397 = vmatpush1.xpose.msra.mxu0 0.0
    %398 = vmatprep.subr.mxu0 0.0
    %399 = vmatpush1.xpose.msra.mxu0 0.0
    %400 = vmatprep.subr.mxu0 0.0
    %401 = vmatpush1.xpose.msra.mxu0 0.0
    %402 = vmatprep.subr.mxu0 0.0
    %403 = vmatpush1.xpose.msra.mxu0 0.0
    %404 = vmatprep.mubr.f32.mxu0 0.0
    %405 = vmatmul.mubr.f32.gmra.mrb[0].mxu0 %v335
    %v406 = vpop.f32.mrb[0].mxu0
    %v407 = vadd.f32 0.0, %v406
    %v408 = vpop.f32.mrb[0].mxu0
    %409 = vdwg.mxu0
    %v411 = vsel %vm105, %v77, 0
    %v414 = vsel %vm105, %v85, 0
    %416 = vmatprep.subr.mxu0 0.0
    %417 = vmatpush1.xpose.msra.mxu0 %v414
    %418 = vmatprep.subr.mxu0 0.0
    %419 = vmatpush1.xpose.msra.mxu0 0.0
    %420 = vmatprep.subr.mxu0 0.0
    %421 = vmatpush1.xpose.msra.mxu0 0.0
    %422 = vmatprep.subr.mxu0 0.0
    %423 = vmatpush1.xpose.msra.mxu0 0.0
    %424 = vmatprep.subr.mxu0 0.0
    %425 = vmatpush1.xpose.msra.mxu0 0.0
    %426 = vmatprep.subr.mxu0 0.0
    %427 = vmatpush1.xpose.msra.mxu0 0.0
    %428 = vmatprep.subr.mxu0 0.0
    %429 = vmatpush1.xpose.msra.mxu0 0.0
    %430 = vmatprep.subr.mxu0 0.0
    %431 = vmatpush1.xpose.msra.mxu0 0.0
    %432 = vmatprep.subr.mxu0 0.0
    %433 = vmatpush1.xpose.msra.mxu0 0.0
    %434 = vmatprep.subr.mxu0 0.0
    %435 = vmatpush1.xpose.msra.mxu0 0.0
    %436 = vmatprep.subr.mxu0 0.0
    %437 = vmatpush1.xpose.msra.mxu0 0.0
    %438 = vmatprep.subr.mxu0 0.0
    %439 = vmatpush1.xpose.msra.mxu0 0.0
    %440 = vmatprep.subr.mxu0 0.0
    %441 = vmatpush1.xpose.msra.mxu0 0.0
    %442 = vmatprep.subr.mxu0 0.0
    %443 = vmatpush1.xpose.msra.mxu0 0.0
    %444 = vmatprep.subr.mxu0 0.0
    %445 = vmatpush1.xpose.msra.mxu0 0.0
    %446 = vmatprep.subr.mxu0 0.0
    %447 = vmatpush1.xpose.msra.mxu0 0.0
    %448 = vmatprep.subr.mxu0 0.0
    %449 = vmatpush1.xpose.msra.mxu0 0.0
    %450 = vmatprep.subr.mxu0 0.0
    %451 = vmatpush1.xpose.msra.mxu0 0.0
    %452 = vmatprep.subr.mxu0 0.0
    %453 = vmatpush1.xpose.msra.mxu0 0.0
    %454 = vmatprep.subr.mxu0 0.0
    %455 = vmatpush1.xpose.msra.mxu0 0.0
    %456 = vmatprep.subr.mxu0 0.0
    %457 = vmatpush1.xpose.msra.mxu0 0.0
    %458 = vmatprep.subr.mxu0 0.0
    %459 = vmatpush1.xpose.msra.mxu0 0.0
    %460 = vmatprep.subr.mxu0 0.0
    %461 = vmatpush1.xpose.msra.mxu0 0.0
    %462 = vmatprep.subr.mxu0 0.0
    %463 = vmatpush1.xpose.msra.mxu0 0.0
    %464 = vmatprep.subr.mxu0 0.0
    %465 = vmatpush1.xpose.msra.mxu0 0.0
    %466 = vmatprep.subr.mxu0 0.0
    %467 = vmatpush1.xpose.msra.mxu0 0.0
    %468 = vmatprep.subr.mxu0 0.0
    %469 = vmatpush1.xpose.msra.mxu0 0.0
    %470 = vmatprep.subr.mxu0 0.0
    %471 = vmatpush1.xpose.msra.mxu0 0.0
    %472 = vmatprep.subr.mxu0 0.0
    %473 = vmatpush1.xpose.msra.mxu0 0.0
    %474 = vmatprep.subr.mxu0 0.0
    %475 = vmatpush1.xpose.msra.mxu0 0.0
    %476 = vmatprep.subr.mxu0 0.0
    %477 = vmatpush1.xpose.msra.mxu0 0.0
    %478 = vmatprep.subr.mxu0 0.0
    %479 = vmatpush1.xpose.msra.mxu0 0.0
    %480 = vmatprep.mubr.f32.mxu0 0.0
    %481 = vmatmul.mubr.f32.gmra.mrb[0].mxu0 %v411
    %v482 = vpop.f32.mrb[0].mxu0
    %v483 = vadd.f32 0.0, %v482
    %v484 = vpop.f32.mrb[0].mxu0
    %485 = vdwg.mxu0
    %v487 = vsel %vm105, %v78, 0
    %v490 = vsel %vm105, %v86, 0
    %492 = vmatprep.subr.mxu0 0.0
    %493 = vmatpush1.xpose.msra.mxu0 %v490
    %494 = vmatprep.subr.mxu0 0.0
    %495 = vmatpush1.xpose.msra.mxu0 0.0
    %496 = vmatprep.subr.mxu0 0.0
    %497 = vmatpush1.xpose.msra.mxu0 0.0
    %498 = vmatprep.subr.mxu0 0.0
    %499 = vmatpush1.xpose.msra.mxu0 0.0
    %500 = vmatprep.subr.mxu0 0.0
    %501 = vmatpush1.xpose.msra.mxu0 0.0
    %502 = vmatprep.subr.mxu0 0.0
    %503 = vmatpush1.xpose.msra.mxu0 0.0
    %504 = vmatprep.subr.mxu0 0.0
    %505 = vmatpush1.xpose.msra.mxu0 0.0
    %506 = vmatprep.subr.mxu0 0.0
    %507 = vmatpush1.xpose.msra.mxu0 0.0
    %508 = vmatprep.subr.mxu0 0.0
    %509 = vmatpush1.xpose.msra.mxu0 0.0
    %510 = vmatprep.subr.mxu0 0.0
    %511 = vmatpush1.xpose.msra.mxu0 0.0
    %512 = vmatprep.subr.mxu0 0.0
    %513 = vmatpush1.xpose.msra.mxu0 0.0
    %514 = vmatprep.subr.mxu0 0.0
    %515 = vmatpush1.xpose.msra.mxu0 0.0
    %516 = vmatprep.subr.mxu0 0.0
    %517 = vmatpush1.xpose.msra.mxu0 0.0
    %518 = vmatprep.subr.mxu0 0.0
    %519 = vmatpush1.xpose.msra.mxu0 0.0
    %520 = vmatprep.subr.mxu0 0.0
    %521 = vmatpush1.xpose.msra.mxu0 0.0
    %522 = vmatprep.subr.mxu0 0.0
    %523 = vmatpush1.xpose.msra.mxu0 0.0
    %524 = vmatprep.subr.mxu0 0.0
    %525 = vmatpush1.xpose.msra.mxu0 0.0
    %526 = vmatprep.subr.mxu0 0.0
    %527 = vmatpush1.xpose.msra.mxu0 0.0
    %528 = vmatprep.subr.mxu0 0.0
    %529 = vmatpush1.xpose.msra.mxu0 0.0
    %530 = vmatprep.subr.mxu0 0.0
    %531 = vmatpush1.xpose.msra.mxu0 0.0
    %532 = vmatprep.subr.mxu0 0.0
    %533 = vmatpush1.xpose.msra.mxu0 0.0
    %534 = vmatprep.subr.mxu0 0.0
    %535 = vmatpush1.xpose.msra.mxu0 0.0
    %536 = vmatprep.subr.mxu0 0.0
    %537 = vmatpush1.xpose.msra.mxu0 0.0
    %538 = vmatprep.subr.mxu0 0.0
    %539 = vmatpush1.xpose.msra.mxu0 0.0
    %540 = vmatprep.subr.mxu0 0.0
    %541 = vmatpush1.xpose.msra.mxu0 0.0
    %542 = vmatprep.subr.mxu0 0.0
    %543 = vmatpush1.xpose.msra.mxu0 0.0
    %544 = vmatprep.subr.mxu0 0.0
    %545 = vmatpush1.xpose.msra.mxu0 0.0
    %546 = vmatprep.subr.mxu0 0.0
    %547 = vmatpush1.xpose.msra.mxu0 0.0
    %548 = vmatprep.subr.mxu0 0.0
    %549 = vmatpush1.xpose.msra.mxu0 0.0
    %550 = vmatprep.subr.mxu0 0.0
    %551 = vmatpush1.xpose.msra.mxu0 0.0
    %552 = vmatprep.subr.mxu0 0.0
    %553 = vmatpush1.xpose.msra.mxu0 0.0
    %554 = vmatprep.subr.mxu0 0.0
    %555 = vmatpush1.xpose.msra.mxu0 0.0
    %556 = vmatprep.mubr.f32.mxu0 0.0
    %557 = vmatmul.mubr.f32.gmra.mrb[0].mxu0 %v487
    %v558 = vpop.f32.mrb[0].mxu0
    %v559 = vadd.f32 0.0, %v558
    %v560 = vpop.f32.mrb[0].mxu0
    %561 = vdwg.mxu0
    %v563 = vsel %vm105, %v79, 0
    %v566 = vsel %vm105, %v87, 0
    %568 = vmatprep.subr.mxu0 0.0
    %569 = vmatpush1.xpose.msra.mxu0 %v566
    %570 = vmatprep.subr.mxu0 0.0
    %571 = vmatpush1.xpose.msra.mxu0 0.0
    %572 = vmatprep.subr.mxu0 0.0
    %573 = vmatpush1.xpose.msra.mxu0 0.0
    %574 = vmatprep.subr.mxu0 0.0
    %575 = vmatpush1.xpose.msra.mxu0 0.0
    %576 = vmatprep.subr.mxu0 0.0
    %577 = vmatpush1.xpose.msra.mxu0 0.0
    %578 = vmatprep.subr.mxu0 0.0
    %579 = vmatpush1.xpose.msra.mxu0 0.0
    %580 = vmatprep.subr.mxu0 0.0
    %581 = vmatpush1.xpose.msra.mxu0 0.0
    %582 = vmatprep.subr.mxu0 0.0
    %583 = vmatpush1.xpose.msra.mxu0 0.0
    %584 = vmatprep.subr.mxu0 0.0
    %585 = vmatpush1.xpose.msra.mxu0 0.0
    %586 = vmatprep.subr.mxu0 0.0
    %587 = vmatpush1.xpose.msra.mxu0 0.0
    %588 = vmatprep.subr.mxu0 0.0
    %589 = vmatpush1.xpose.msra.mxu0 0.0
    %590 = vmatprep.subr.mxu0 0.0
    %591 = vmatpush1.xpose.msra.mxu0 0.0
    %592 = vmatprep.subr.mxu0 0.0
    %593 = vmatpush1.xpose.msra.mxu0 0.0
    %594 = vmatprep.subr.mxu0 0.0
    %595 = vmatpush1.xpose.msra.mxu0 0.0
    %596 = vmatprep.subr.mxu0 0.0
    %597 = vmatpush1.xpose.msra.mxu0 0.0
    %598 = vmatprep.subr.mxu0 0.0
    %599 = vmatpush1.xpose.msra.mxu0 0.0
    %600 = vmatprep.subr.mxu0 0.0
    %601 = vmatpush1.xpose.msra.mxu0 0.0
    %602 = vmatprep.subr.mxu0 0.0
    %603 = vmatpush1.xpose.msra.mxu0 0.0
    %604 = vmatprep.subr.mxu0 0.0
    %605 = vmatpush1.xpose.msra.mxu0 0.0
    %606 = vmatprep.subr.mxu0 0.0
    %607 = vmatpush1.xpose.msra.mxu0 0.0
    %608 = vmatprep.subr.mxu0 0.0
    %609 = vmatpush1.xpose.msra.mxu0 0.0
    %610 = vmatprep.subr.mxu0 0.0
    %611 = vmatpush1.xpose.msra.mxu0 0.0
    %612 = vmatprep.subr.mxu0 0.0
    %613 = vmatpush1.xpose.msra.mxu0 0.0
    %614 = vmatprep.subr.mxu0 0.0
    %615 = vmatpush1.xpose.msra.mxu0 0.0
    %616 = vmatprep.subr.mxu0 0.0
    %617 = vmatpush1.xpose.msra.mxu0 0.0
    %618 = vmatprep.subr.mxu0 0.0
    %619 = vmatpush1.xpose.msra.mxu0 0.0
    %620 = vmatprep.subr.mxu0 0.0
    %621 = vmatpush1.xpose.msra.mxu0 0.0
    %622 = vmatprep.subr.mxu0 0.0
    %623 = vmatpush1.xpose.msra.mxu0 0.0
    %624 = vmatprep.subr.mxu0 0.0
    %625 = vmatpush1.xpose.msra.mxu0 0.0
    %626 = vmatprep.subr.mxu0 0.0
    %627 = vmatpush1.xpose.msra.mxu0 0.0
    %628 = vmatprep.subr.mxu0 0.0
    %629 = vmatpush1.xpose.msra.mxu0 0.0
    %630 = vmatprep.subr.mxu0 0.0
    %631 = vmatpush1.xpose.msra.mxu0 0.0
    %632 = vmatprep.mubr.f32.mxu0 0.0
    %633 = vmatmul.mubr.f32.gmra.mrb[0].mxu0 %v563
    %v634 = vpop.f32.mrb[0].mxu0
    %v635 = vadd.f32 0.0, %v634
    %v636 = vpop.f32.mrb[0].mxu0
    %637 = vdwg.mxu0
    %v639 = vsel %vm105, %v80, 0
    %v642 = vsel %vm105, %v88, 0
    %644 = vmatprep.subr.mxu0 0.0
    %645 = vmatpush1.xpose.msra.mxu0 %v642
    %646 = vmatprep.subr.mxu0 0.0
    %647 = vmatpush1.xpose.msra.mxu0 0.0
    %648 = vmatprep.subr.mxu0 0.0
    %649 = vmatpush1.xpose.msra.mxu0 0.0
    %650 = vmatprep.subr.mxu0 0.0
    %651 = vmatpush1.xpose.msra.mxu0 0.0
    %652 = vmatprep.subr.mxu0 0.0
    %653 = vmatpush1.xpose.msra.mxu0 0.0
    %654 = vmatprep.subr.mxu0 0.0
    %655 = vmatpush1.xpose.msra.mxu0 0.0
    %656 = vmatprep.subr.mxu0 0.0
    %657 = vmatpush1.xpose.msra.mxu0 0.0
    %658 = vmatprep.subr.mxu0 0.0
    %659 = vmatpush1.xpose.msra.mxu0 0.0
    %660 = vmatprep.subr.mxu0 0.0
    %661 = vmatpush1.xpose.msra.mxu0 0.0
    %662 = vmatprep.subr.mxu0 0.0
    %663 = vmatpush1.xpose.msra.mxu0 0.0
    %664 = vmatprep.subr.mxu0 0.0
    %665 = vmatpush1.xpose.msra.mxu0 0.0
    %666 = vmatprep.subr.mxu0 0.0
    %667 = vmatpush1.xpose.msra.mxu0 0.0
    %668 = vmatprep.subr.mxu0 0.0
    %669 = vmatpush1.xpose.msra.mxu0 0.0
    %670 = vmatprep.subr.mxu0 0.0
    %671 = vmatpush1.xpose.msra.mxu0 0.0
    %672 = vmatprep.subr.mxu0 0.0
    %673 = vmatpush1.xpose.msra.mxu0 0.0
    %674 = vmatprep.subr.mxu0 0.0
    %675 = vmatpush1.xpose.msra.mxu0 0.0
    %676 = vmatprep.subr.mxu0 0.0
    %677 = vmatpush1.xpose.msra.mxu0 0.0
    %678 = vmatprep.subr.mxu0 0.0
    %679 = vmatpush1.xpose.msra.mxu0 0.0
    %680 = vmatprep.subr.mxu0 0.0
    %681 = vmatpush1.xpose.msra.mxu0 0.0
    %682 = vmatprep.subr.mxu0 0.0
    %683 = vmatpush1.xpose.msra.mxu0 0.0
    %684 = vmatprep.subr.mxu0 0.0
    %685 = vmatpush1.xpose.msra.mxu0 0.0
    %686 = vmatprep.subr.mxu0 0.0
    %687 = vmatpush1.xpose.msra.mxu0 0.0
    %688 = vmatprep.subr.mxu0 0.0
    %689 = vmatpush1.xpose.msra.mxu0 0.0
    %690 = vmatprep.subr.mxu0 0.0
    %691 = vmatpush1.xpose.msra.mxu0 0.0
    %692 = vmatprep.subr.mxu0 0.0
    %693 = vmatpush1.xpose.msra.mxu0 0.0
    %694 = vmatprep.subr.mxu0 0.0
    %695 = vmatpush1.xpose.msra.mxu0 0.0
    %696 = vmatprep.subr.mxu0 0.0
    %697 = vmatpush1.xpose.msra.mxu0 0.0
    %698 = vmatprep.subr.mxu0 0.0
    %699 = vmatpush1.xpose.msra.mxu0 0.0
    %700 = vmatprep.subr.mxu0 0.0
    %701 = vmatpush1.xpose.msra.mxu0 0.0
    %702 = vmatprep.subr.mxu0 0.0
    %703 = vmatpush1.xpose.msra.mxu0 0.0
    %704 = vmatprep.subr.mxu0 0.0
    %705 = vmatpush1.xpose.msra.mxu0 0.0
    %706 = vmatprep.subr.mxu0 0.0
    %707 = vmatpush1.xpose.msra.mxu0 0.0
    %708 = vmatprep.mubr.f32.mxu0 0.0
    %709 = vmatmul.mubr.f32.gmra.mrb[0].mxu0 %v639
    %v710 = vpop.f32.mrb[0].mxu0
    %v711 = vadd.f32 0.0, %v710
    %v712 = vpop.f32.mrb[0].mxu0
    %713 = vdwg.mxu0
    %v714 = vmul.f32 %v179, 0.17677669
    %v715 = vmul.f32 %v255, 0.17677669
    %v716 = vmul.f32 %v331, 0.17677669
    %v717 = vmul.f32 %v407, 0.17677669
    %v718 = vmul.f32 %v483, 0.17677669
    %v719 = vmul.f32 %v559, 0.17677669
    %v720 = vmul.f32 %v635, 0.17677669
    %v721 = vmul.f32 %v711, 0.17677669
    %vm722 = vcmask 64512
    %v723 = vsel %vm722, %v714, -inf
    %724 = vmax.xlane.f32.xlu0 %v723
    %v725 = vpop.xlane.xlu0 %724
    %v726 = vsel %vm722, %v715, -inf
    %727 = vmax.xlane.f32.xlu0 %v726
    %v728 = vpop.xlane.xlu0 %727
    %v729 = vsel %vm722, %v716, -inf
    %730 = vmax.xlane.f32.xlu0 %v729
    %v731 = vpop.xlane.xlu0 %730
    %v732 = vsel %vm722, %v717, -inf
    %733 = vmax.xlane.f32.xlu0 %v732
    %v734 = vpop.xlane.xlu0 %733
    %v735 = vsel %vm722, %v718, -inf
    %736 = vmax.xlane.f32.xlu0 %v735
    %v737 = vpop.xlane.xlu0 %736
    %v738 = vsel %vm722, %v719, -inf
    %739 = vmax.xlane.f32.xlu0 %v738
    %v740 = vpop.xlane.xlu0 %739
    %v741 = vsel %vm722, %v720, -inf
    %742 = vmax.xlane.f32.xlu0 %v741
    %v743 = vpop.xlane.xlu0 %742
    %v744 = vsel %vm722, %v721, -inf
    %745 = vmax.xlane.f32.xlu0 %v744
    %v746 = vpop.xlane.xlu0 %745
    %v747 = vsub.f32 %v714, %v725
    %v748 = vsub.f32 %v715, %v728
    %v749 = vsub.f32 %v716, %v731
    %v750 = vsub.f32 %v717, %v734
    %v751 = vsub.f32 %v718, %v737
    %v752 = vsub.f32 %v719, %v740
    %v753 = vsub.f32 %v720, %v743
    %v754 = vsub.f32 %v721, %v746
    %v755 = vmul.f32 %v747, 1.442695
    %v756 = vpow.pop %v755
    %v757 = vmul.f32 %v748, 1.442695
    %v758 = vpow.pop %v757
    %v759 = vmul.f32 %v749, 1.442695
    %v760 = vpow.pop %v759
    %v761 = vmul.f32 %v750, 1.442695
    %v762 = vpow.pop %v761
    %v763 = vmul.f32 %v751, 1.442695
    %v764 = vpow.pop %v763
    %v765 = vmul.f32 %v752, 1.442695
    %v766 = vpow.pop %v765
    %v767 = vmul.f32 %v753, 1.442695
    %v768 = vpow.pop %v767
    %v769 = vmul.f32 %v754, 1.442695
    %v770 = vpow.pop %v769
    %v771 = vsel %vm722, %v756, 0.0
    %772 = vadd.xlane.f32.xlu0 %v771
    %v773 = vpop.xlane.xlu0 %772
    %v774 = vsel %vm722, %v758, 0.0
    %775 = vadd.xlane.f32.xlu0 %v774
    %v776 = vpop.xlane.xlu0 %775
    %v777 = vsel %vm722, %v760, 0.0
    %778 = vadd.xlane.f32.xlu0 %v777
    %v779 = vpop.xlane.xlu0 %778
    %v780 = vsel %vm722, %v762, 0.0
    %781 = vadd.xlane.f32.xlu0 %v780
    %v782 = vpop.xlane.xlu0 %781
    %v783 = vsel %vm722, %v764, 0.0
    %784 = vadd.xlane.f32.xlu0 %v783
    %v785 = vpop.xlane.xlu0 %784
    %v786 = vsel %vm722, %v766, 0.0
    %787 = vadd.xlane.f32.xlu0 %v786
    %v788 = vpop.xlane.xlu0 %787
    %v789 = vsel %vm722, %v768, 0.0
    %790 = vadd.xlane.f32.xlu0 %v789
    %v791 = vpop.xlane.xlu0 %790
    %v792 = vsel %vm722, %v770, 0.0
    %793 = vadd.xlane.f32.xlu0 %v792
    %v794 = vpop.xlane.xlu0 %793
    %v795 = vrcp.pop %v773
    %v796 = vmul.f32 3.3333333, %v795
    %v797 = vrcp.pop %v776
    %v798 = vmul.f32 3.3333333, %v797
    %v799 = vrcp.pop %v779
    %v800 = vmul.f32 3.3333333, %v799
    %v801 = vrcp.pop %v782
    %v802 = vmul.f32 3.3333333, %v801
    %v803 = vrcp.pop %v785
    %v804 = vmul.f32 3.3333333, %v803
    %v805 = vrcp.pop %v788
    %v806 = vmul.f32 3.3333333, %v805
    %v807 = vrcp.pop %v791
    %v808 = vmul.f32 3.3333333, %v807
    %v809 = vrcp.pop %v794
    %v810 = vmul.f32 3.3333333, %v809
    %vm811 = vcmp.ge.f32.partialorder %v97, 0.7
    %vm812 = vcmp.ge.f32.partialorder %v98, 0.7
    %vm813 = vcmp.ge.f32.partialorder %v99, 0.7
    %vm814 = vcmp.ge.f32.partialorder %v100, 0.7
    %vm815 = vcmp.ge.f32.partialorder %v101, 0.7
    %vm816 = vcmp.ge.f32.partialorder %v102, 0.7
    %vm817 = vcmp.ge.f32.partialorder %v103, 0.7
    %vm818 = vcmp.ge.f32.partialorder %v104, 0.7
    %v819 = vmul.f32 %v756, %v796
    %v820 = vmul.f32 %v758, %v798
    %v821 = vmul.f32 %v760, %v800
    %v822 = vmul.f32 %v762, %v802
    %v823 = vmul.f32 %v764, %v804
    %v824 = vmul.f32 %v766, %v806
    %v825 = vmul.f32 %v768, %v808
    %v826 = vmul.f32 %v770, %v810
    %v827 = vsel %vm811, %v819, 0.0
    %v828 = vsel %vm812, %v820, 0.0
    %v829 = vsel %vm813, %v821, 0.0
    %v830 = vsel %vm814, %v822, 0.0
    %v831 = vsel %vm815, %v823, 0.0
    %v832 = vsel %vm816, %v824, 0.0
    %v833 = vsel %vm817, %v825, 0.0
    %v834 = vsel %vm818, %v826, 0.0
    %v836 = vsel %vm722, %v827, 0
    %838 = vmatprep.subr.mxu0 0.0
    %839 = vmatpush1.msra.mxu0 %v89
    %840 = vmatprep.subr.mxu0 0.0
    %841 = vmatpush1.msra.mxu0 0.0
    %842 = vmatprep.subr.mxu0 0.0
    %843 = vmatpush1.msra.mxu0 0.0
    %844 = vmatprep.subr.mxu0 0.0
    %845 = vmatpush1.msra.mxu0 0.0
    %846 = vmatprep.subr.mxu0 0.0
    %847 = vmatpush1.msra.mxu0 0.0
    %848 = vmatprep.subr.mxu0 0.0
    %849 = vmatpush1.msra.mxu0 0.0
    %850 = vmatprep.subr.mxu0 0.0
    %851 = vmatpush1.msra.mxu0 0.0
    %852 = vmatprep.subr.mxu0 0.0
    %853 = vmatpush1.msra.mxu0 0.0
    %854 = vmatprep.subr.mxu0 0.0
    %855 = vmatpush1.msra.mxu0 0.0
    %856 = vmatprep.subr.mxu0 0.0
    %857 = vmatpush1.msra.mxu0 0.0
    %858 = vmatprep.subr.mxu0 0.0
    %859 = vmatpush1.msra.mxu0 0.0
    %860 = vmatprep.subr.mxu0 0.0
    %861 = vmatpush1.msra.mxu0 0.0
    %862 = vmatprep.subr.mxu0 0.0
    %863 = vmatpush1.msra.mxu0 0.0
    %864 = vmatprep.subr.mxu0 0.0
    %865 = vmatpush1.msra.mxu0 0.0
    %866 = vmatprep.subr.mxu0 0.0
    %867 = vmatpush1.msra.mxu0 0.0
    %868 = vmatprep.subr.mxu0 0.0
    %869 = vmatpush1.msra.mxu0 0.0
    %870 = vmatprep.subr.mxu0 0.0
    %871 = vmatpush1.msra.mxu0 0.0
    %872 = vmatprep.subr.mxu0 0.0
    %873 = vmatpush1.msra.mxu0 0.0
    %874 = vmatprep.subr.mxu0 0.0
    %875 = vmatpush1.msra.mxu0 0.0
    %876 = vmatprep.subr.mxu0 0.0
    %877 = vmatpush1.msra.mxu0 0.0
    %878 = vmatprep.subr.mxu0 0.0
    %879 = vmatpush1.msra.mxu0 0.0
    %880 = vmatprep.subr.mxu0 0.0
    %881 = vmatpush1.msra.mxu0 0.0
    %882 = vmatprep.subr.mxu0 0.0
    %883 = vmatpush1.msra.mxu0 0.0
    %884 = vmatprep.subr.mxu0 0.0
    %885 = vmatpush1.msra.mxu0 0.0
    %886 = vmatprep.subr.mxu0 0.0
    %887 = vmatpush1.msra.mxu0 0.0
    %888 = vmatprep.subr.mxu0 0.0
    %889 = vmatpush1.msra.mxu0 0.0
    %890 = vmatprep.subr.mxu0 0.0
    %891 = vmatpush1.msra.mxu0 0.0
    %892 = vmatprep.subr.mxu0 0.0
    %893 = vmatpush1.msra.mxu0 0.0
    %894 = vmatprep.subr.mxu0 0.0
    %895 = vmatpush1.msra.mxu0 0.0
    %896 = vmatprep.subr.mxu0 0.0
    %897 = vmatpush1.msra.mxu0 0.0
    %898 = vmatprep.subr.mxu0 0.0
    %899 = vmatpush1.msra.mxu0 0.0
    %900 = vmatprep.subr.mxu0 0.0
    %901 = vmatpush1.msra.mxu0 0.0
    %902 = vmatprep.mubr.f32.mxu0 0.0
    %903 = vmatmul.mubr.f32.gmra.mrb[0].mxu0 %v836
    %v904 = vpop.f32.mrb[0].mxu0
    %v905 = vadd.f32 0.0, %v904
    %v906 = vpop.f32.mrb[0].mxu0
    %907 = vdwg.mxu0
    %v909 = vsel %vm722, %v828, 0
    %911 = vmatprep.subr.mxu0 0.0
    %912 = vmatpush1.msra.mxu0 %v90
    %913 = vmatprep.subr.mxu0 0.0
    %914 = vmatpush1.msra.mxu0 0.0
    %915 = vmatprep.subr.mxu0 0.0
    %916 = vmatpush1.msra.mxu0 0.0
    %917 = vmatprep.subr.mxu0 0.0
    %918 = vmatpush1.msra.mxu0 0.0
    %919 = vmatprep.subr.mxu0 0.0
    %920 = vmatpush1.msra.mxu0 0.0
    %921 = vmatprep.subr.mxu0 0.0
    %922 = vmatpush1.msra.mxu0 0.0
    %923 = vmatprep.subr.mxu0 0.0
    %924 = vmatpush1.msra.mxu0 0.0
    %925 = vmatprep.subr.mxu0 0.0
    %926 = vmatpush1.msra.mxu0 0.0
    %927 = vmatprep.subr.mxu0 0.0
    %928 = vmatpush1.msra.mxu0 0.0
    %929 = vmatprep.subr.mxu0 0.0
    %930 = vmatpush1.msra.mxu0 0.0
    %931 = vmatprep.subr.mxu0 0.0
    %932 = vmatpush1.msra.mxu0 0.0
    %933 = vmatprep.subr.mxu0 0.0
    %934 = vmatpush1.msra.mxu0 0.0
    %935 = vmatprep.subr.mxu0 0.0
    %936 = vmatpush1.msra.mxu0 0.0
    %937 = vmatprep.subr.mxu0 0.0
    %938 = vmatpush1.msra.mxu0 0.0
    %939 = vmatprep.subr.mxu0 0.0
    %940 = vmatpush1.msra.mxu0 0.0
    %941 = vmatprep.subr.mxu0 0.0
    %942 = vmatpush1.msra.mxu0 0.0
    %943 = vmatprep.subr.mxu0 0.0
    %944 = vmatpush1.msra.mxu0 0.0
    %945 = vmatprep.subr.mxu0 0.0
    %946 = vmatpush1.msra.mxu0 0.0
    %947 = vmatprep.subr.mxu0 0.0
    %948 = vmatpush1.msra.mxu0 0.0
    %949 = vmatprep.subr.mxu0 0.0
    %950 = vmatpush1.msra.mxu0 0.0
    %951 = vmatprep.subr.mxu0 0.0
    %952 = vmatpush1.msra.mxu0 0.0
    %953 = vmatprep.subr.mxu0 0.0
    %954 = vmatpush1.msra.mxu0 0.0
    %955 = vmatprep.subr.mxu0 0.0
    %956 = vmatpush1.msra.mxu0 0.0
    %957 = vmatprep.subr.mxu0 0.0
    %958 = vmatpush1.msra.mxu0 0.0
    %959 = vmatprep.subr.mxu0 0.0
    %960 = vmatpush1.msra.mxu0 0.0
    %961 = vmatprep.subr.mxu0 0.0
    %962 = vmatpush1.msra.mxu0 0.0
    %963 = vmatprep.subr.mxu0 0.0
    %964 = vmatpush1.msra.mxu0 0.0
    %965 = vmatprep.subr.mxu0 0.0
    %966 = vmatpush1.msra.mxu0 0.0
    %967 = vmatprep.subr.mxu0 0.0
    %968 = vmatpush1.msra.mxu0 0.0
    %969 = vmatprep.subr.mxu0 0.0
    %970 = vmatpush1.msra.mxu0 0.0
    %971 = vmatprep.subr.mxu0 0.0
    %972 = vmatpush1.msra.mxu0 0.0
    %973 = vmatprep.subr.mxu0 0.0
    %974 = vmatpush1.msra.mxu0 0.0
    %975 = vmatprep.mubr.f32.mxu0 0.0
    %976 = vmatmul.mubr.f32.gmra.mrb[0].mxu0 %v909
    %v977 = vpop.f32.mrb[0].mxu0
    %v978 = vadd.f32 0.0, %v977
    %v979 = vpop.f32.mrb[0].mxu0
    %980 = vdwg.mxu0
    %v982 = vsel %vm722, %v829, 0
    %984 = vmatprep.subr.mxu0 0.0
    %985 = vmatpush1.msra.mxu0 %v91
    %986 = vmatprep.subr.mxu0 0.0
    %987 = vmatpush1.msra.mxu0 0.0
    %988 = vmatprep.subr.mxu0 0.0
    %989 = vmatpush1.msra.mxu0 0.0
    %990 = vmatprep.subr.mxu0 0.0
    %991 = vmatpush1.msra.mxu0 0.0
    %992 = vmatprep.subr.mxu0 0.0
    %993 = vmatpush1.msra.mxu0 0.0
    %994 = vmatprep.subr.mxu0 0.0
    %995 = vmatpush1.msra.mxu0 0.0
    %996 = vmatprep.subr.mxu0 0.0
    %997 = vmatpush1.msra.mxu0 0.0
    %998 = vmatprep.subr.mxu0 0.0
    %999 = vmatpush1.msra.mxu0 0.0
    %1000 = vmatprep.subr.mxu0 0.0
    %1001 = vmatpush1.msra.mxu0 0.0
    %1002 = vmatprep.subr.mxu0 0.0
    %1003 = vmatpush1.msra.mxu0 0.0
    %1004 = vmatprep.subr.mxu0 0.0
    %1005 = vmatpush1.msra.mxu0 0.0
    %1006 = vmatprep.subr.mxu0 0.0
    %1007 = vmatpush1.msra.mxu0 0.0
    %1008 = vmatprep.subr.mxu0 0.0
    %1009 = vmatpush1.msra.mxu0 0.0
    %1010 = vmatprep.subr.mxu0 0.0
    %1011 = vmatpush1.msra.mxu0 0.0
    %1012 = vmatprep.subr.mxu0 0.0
    %1013 = vmatpush1.msra.mxu0 0.0
    %1014 = vmatprep.subr.mxu0 0.0
    %1015 = vmatpush1.msra.mxu0 0.0
    %1016 = vmatprep.subr.mxu0 0.0
    %1017 = vmatpush1.msra.mxu0 0.0
    %1018 = vmatprep.subr.mxu0 0.0
    %1019 = vmatpush1.msra.mxu0 0.0
    %1020 = vmatprep.subr.mxu0 0.0
    %1021 = vmatpush1.msra.mxu0 0.0
    %1022 = vmatprep.subr.mxu0 0.0
    %1023 = vmatpush1.msra.mxu0 0.0
    %1024 = vmatprep.subr.mxu0 0.0
    %1025 = vmatpush1.msra.mxu0 0.0
    %1026 = vmatprep.subr.mxu0 0.0
    %1027 = vmatpush1.msra.mxu0 0.0
    %1028 = vmatprep.subr.mxu0 0.0
    %1029 = vmatpush1.msra.mxu0 0.0
    %1030 = vmatprep.subr.mxu0 0.0
    %1031 = vmatpush1.msra.mxu0 0.0
    %1032 = vmatprep.subr.mxu0 0.0
    %1033 = vmatpush1.msra.mxu0 0.0
    %1034 = vmatprep.subr.mxu0 0.0
    %1035 = vmatpush1.msra.mxu0 0.0
    %1036 = vmatprep.subr.mxu0 0.0
    %1037 = vmatpush1.msra.mxu0 0.0
    %1038 = vmatprep.subr.mxu0 0.0
    %1039 = vmatpush1.msra.mxu0 0.0
    %1040 = vmatprep.subr.mxu0 0.0
    %1041 = vmatpush1.msra.mxu0 0.0
    %1042 = vmatprep.subr.mxu0 0.0
    %1043 = vmatpush1.msra.mxu0 0.0
    %1044 = vmatprep.subr.mxu0 0.0
    %1045 = vmatpush1.msra.mxu0 0.0
    %1046 = vmatprep.subr.mxu0 0.0
    %1047 = vmatpush1.msra.mxu0 0.0
    %1048 = vmatprep.mubr.f32.mxu0 0.0
    %1049 = vmatmul.mubr.f32.gmra.mrb[0].mxu0 %v982
    %v1050 = vpop.f32.mrb[0].mxu0
    %v1051 = vadd.f32 0.0, %v1050
    %v1052 = vpop.f32.mrb[0].mxu0
    %1053 = vdwg.mxu0
    %v1055 = vsel %vm722, %v830, 0
    %1057 = vmatprep.subr.mxu0 0.0
    %1058 = vmatpush1.msra.mxu0 %v92
    %1059 = vmatprep.subr.mxu0 0.0
    %1060 = vmatpush1.msra.mxu0 0.0
    %1061 = vmatprep.subr.mxu0 0.0
    %1062 = vmatpush1.msra.mxu0 0.0
    %1063 = vmatprep.subr.mxu0 0.0
    %1064 = vmatpush1.msra.mxu0 0.0
    %1065 = vmatprep.subr.mxu0 0.0
    %1066 = vmatpush1.msra.mxu0 0.0
    %1067 = vmatprep.subr.mxu0 0.0
    %1068 = vmatpush1.msra.mxu0 0.0
    %1069 = vmatprep.subr.mxu0 0.0
    %1070 = vmatpush1.msra.mxu0 0.0
    %1071 = vmatprep.subr.mxu0 0.0
    %1072 = vmatpush1.msra.mxu0 0.0
    %1073 = vmatprep.subr.mxu0 0.0
    %1074 = vmatpush1.msra.mxu0 0.0
    %1075 = vmatprep.subr.mxu0 0.0
    %1076 = vmatpush1.msra.mxu0 0.0
    %1077 = vmatprep.subr.mxu0 0.0
    %1078 = vmatpush1.msra.mxu0 0.0
    %1079 = vmatprep.subr.mxu0 0.0
    %1080 = vmatpush1.msra.mxu0 0.0
    %1081 = vmatprep.subr.mxu0 0.0
    %1082 = vmatpush1.msra.mxu0 0.0
    %1083 = vmatprep.subr.mxu0 0.0
    %1084 = vmatpush1.msra.mxu0 0.0
    %1085 = vmatprep.subr.mxu0 0.0
    %1086 = vmatpush1.msra.mxu0 0.0
    %1087 = vmatprep.subr.mxu0 0.0
    %1088 = vmatpush1.msra.mxu0 0.0
    %1089 = vmatprep.subr.mxu0 0.0
    %1090 = vmatpush1.msra.mxu0 0.0
    %1091 = vmatprep.subr.mxu0 0.0
    %1092 = vmatpush1.msra.mxu0 0.0
    %1093 = vmatprep.subr.mxu0 0.0
    %1094 = vmatpush1.msra.mxu0 0.0
    %1095 = vmatprep.subr.mxu0 0.0
    %1096 = vmatpush1.msra.mxu0 0.0
    %1097 = vmatprep.subr.mxu0 0.0
    %1098 = vmatpush1.msra.mxu0 0.0
    %1099 = vmatprep.subr.mxu0 0.0
    %1100 = vmatpush1.msra.mxu0 0.0
    %1101 = vmatprep.subr.mxu0 0.0
    %1102 = vmatpush1.msra.mxu0 0.0
    %1103 = vmatprep.subr.mxu0 0.0
    %1104 = vmatpush1.msra.mxu0 0.0
    %1105 = vmatprep.subr.mxu0 0.0
    %1106 = vmatpush1.msra.mxu0 0.0
    %1107 = vmatprep.subr.mxu0 0.0
    %1108 = vmatpush1.msra.mxu0 0.0
    %1109 = vmatprep.subr.mxu0 0.0
    %1110 = vmatpush1.msra.mxu0 0.0
    %1111 = vmatprep.subr.mxu0 0.0
    %1112 = vmatpush1.msra.mxu0 0.0
    %1113 = vmatprep.subr.mxu0 0.0
    %1114 = vmatpush1.msra.mxu0 0.0
    %1115 = vmatprep.subr.mxu0 0.0
    %1116 = vmatpush1.msra.mxu0 0.0
    %1117 = vmatprep.subr.mxu0 0.0
    %1118 = vmatpush1.msra.mxu0 0.0
    %1119 = vmatprep.subr.mxu0 0.0
    %1120 = vmatpush1.msra.mxu0 0.0
    %1121 = vmatprep.mubr.f32.mxu0 0.0
    %1122 = vmatmul.mubr.f32.gmra.mrb[0].mxu0 %v1055
    %v1123 = vpop.f32.mrb[0].mxu0
    %v1124 = vadd.f32 0.0, %v1123
    %v1125 = vpop.f32.mrb[0].mxu0
    %1126 = vdwg.mxu0
    %v1128 = vsel %vm722, %v831, 0
    %1130 = vmatprep.subr.mxu0 0.0
    %1131 = vmatpush1.msra.mxu0 %v93
    %1132 = vmatprep.subr.mxu0 0.0
    %1133 = vmatpush1.msra.mxu0 0.0
    %1134 = vmatprep.subr.mxu0 0.0
    %1135 = vmatpush1.msra.mxu0 0.0
    %1136 = vmatprep.subr.mxu0 0.0
    %1137 = vmatpush1.msra.mxu0 0.0
    %1138 = vmatprep.subr.mxu0 0.0
    %1139 = vmatpush1.msra.mxu0 0.0
    %1140 = vmatprep.subr.mxu0 0.0
    %1141 = vmatpush1.msra.mxu0 0.0
    %1142 = vmatprep.subr.mxu0 0.0
    %1143 = vmatpush1.msra.mxu0 0.0
    %1144 = vmatprep.subr.mxu0 0.0
    %1145 = vmatpush1.msra.mxu0 0.0
    %1146 = vmatprep.subr.mxu0 0.0
    %1147 = vmatpush1.msra.mxu0 0.0
    %1148 = vmatprep.subr.mxu0 0.0
    %1149 = vmatpush1.msra.mxu0 0.0
    %1150 = vmatprep.subr.mxu0 0.0
    %1151 = vmatpush1.msra.mxu0 0.0
    %1152 = vmatprep.subr.mxu0 0.0
    %1153 = vmatpush1.msra.mxu0 0.0
    %1154 = vmatprep.subr.mxu0 0.0
    %1155 = vmatpush1.msra.mxu0 0.0
    %1156 = vmatprep.subr.mxu0 0.0
    %1157 = vmatpush1.msra.mxu0 0.0
    %1158 = vmatprep.subr.mxu0 0.0
    %1159 = vmatpush1.msra.mxu0 0.0
    %1160 = vmatprep.subr.mxu0 0.0
    %1161 = vmatpush1.msra.mxu0 0.0
    %1162 = vmatprep.subr.mxu0 0.0
    %1163 = vmatpush1.msra.mxu0 0.0
    %1164 = vmatprep.subr.mxu0 0.0
    %1165 = vmatpush1.msra.mxu0 0.0
    %1166 = vmatprep.subr.mxu0 0.0
    %1167 = vmatpush1.msra.mxu0 0.0
    %1168 = vmatprep.subr.mxu0 0.0
    %1169 = vmatpush1.msra.mxu0 0.0
    %1170 = vmatprep.subr.mxu0 0.0
    %1171 = vmatpush1.msra.mxu0 0.0
    %1172 = vmatprep.subr.mxu0 0.0
    %1173 = vmatpush1.msra.mxu0 0.0
    %1174 = vmatprep.subr.mxu0 0.0
    %1175 = vmatpush1.msra.mxu0 0.0
    %1176 = vmatprep.subr.mxu0 0.0
    %1177 = vmatpush1.msra.mxu0 0.0
    %1178 = vmatprep.subr.mxu0 0.0
    %1179 = vmatpush1.msra.mxu0 0.0
    %1180 = vmatprep.subr.mxu0 0.0
    %1181 = vmatpush1.msra.mxu0 0.0
    %1182 = vmatprep.subr.mxu0 0.0
    %1183 = vmatpush1.msra.mxu0 0.0
    %1184 = vmatprep.subr.mxu0 0.0
    %1185 = vmatpush1.msra.mxu0 0.0
    %1186 = vmatprep.subr.mxu0 0.0
    %1187 = vmatpush1.msra.mxu0 0.0
    %1188 = vmatprep.subr.mxu0 0.0
    %1189 = vmatpush1.msra.mxu0 0.0
    %1190 = vmatprep.subr.mxu0 0.0
    %1191 = vmatpush1.msra.mxu0 0.0
    %1192 = vmatprep.subr.mxu0 0.0
    %1193 = vmatpush1.msra.mxu0 0.0
    %1194 = vmatprep.mubr.f32.mxu0 0.0
    %1195 = vmatmul.mubr.f32.gmra.mrb[0].mxu0 %v1128
    %v1196 = vpop.f32.mrb[0].mxu0
    %v1197 = vadd.f32 0.0, %v1196
    %v1198 = vpop.f32.mrb[0].mxu0
    %1199 = vdwg.mxu0
    %v1201 = vsel %vm722, %v832, 0
    %1203 = vmatprep.subr.mxu0 0.0
    %1204 = vmatpush1.msra.mxu0 %v94
    %1205 = vmatprep.subr.mxu0 0.0
    %1206 = vmatpush1.msra.mxu0 0.0
    %1207 = vmatprep.subr.mxu0 0.0
    %1208 = vmatpush1.msra.mxu0 0.0
    %1209 = vmatprep.subr.mxu0 0.0
    %1210 = vmatpush1.msra.mxu0 0.0
    %1211 = vmatprep.subr.mxu0 0.0
    %1212 = vmatpush1.msra.mxu0 0.0
    %1213 = vmatprep.subr.mxu0 0.0
    %1214 = vmatpush1.msra.mxu0 0.0
    %1215 = vmatprep.subr.mxu0 0.0
    %1216 = vmatpush1.msra.mxu0 0.0
    %1217 = vmatprep.subr.mxu0 0.0
    %1218 = vmatpush1.msra.mxu0 0.0
    %1219 = vmatprep.subr.mxu0 0.0
    %1220 = vmatpush1.msra.mxu0 0.0
    %1221 = vmatprep.subr.mxu0 0.0
    %1222 = vmatpush1.msra.mxu0 0.0
    %1223 = vmatprep.subr.mxu0 0.0
    %1224 = vmatpush1.msra.mxu0 0.0
    %1225 = vmatprep.subr.mxu0 0.0
    %1226 = vmatpush1.msra.mxu0 0.0
    %1227 = vmatprep.subr.mxu0 0.0
    %1228 = vmatpush1.msra.mxu0 0.0
    %1229 = vmatprep.subr.mxu0 0.0
    %1230 = vmatpush1.msra.mxu0 0.0
    %1231 = vmatprep.subr.mxu0 0.0
    %1232 = vmatpush1.msra.mxu0 0.0
    %1233 = vmatprep.subr.mxu0 0.0
    %1234 = vmatpush1.msra.mxu0 0.0
    %1235 = vmatprep.subr.mxu0 0.0
    %1236 = vmatpush1.msra.mxu0 0.0
    %1237 = vmatprep.subr.mxu0 0.0
    %1238 = vmatpush1.msra.mxu0 0.0
    %1239 = vmatprep.subr.mxu0 0.0
    %1240 = vmatpush1.msra.mxu0 0.0
    %1241 = vmatprep.subr.mxu0 0.0
    %1242 = vmatpush1.msra.mxu0 0.0
    %1243 = vmatprep.subr.mxu0 0.0
    %1244 = vmatpush1.msra.mxu0 0.0
    %1245 = vmatprep.subr.mxu0 0.0
    %1246 = vmatpush1.msra.mxu0 0.0
    %1247 = vmatprep.subr.mxu0 0.0
    %1248 = vmatpush1.msra.mxu0 0.0
    %1249 = vmatprep.subr.mxu0 0.0
    %1250 = vmatpush1.msra.mxu0 0.0
    %1251 = vmatprep.subr.mxu0 0.0
    %1252 = vmatpush1.msra.mxu0 0.0
    %1253 = vmatprep.subr.mxu0 0.0
    %1254 = vmatpush1.msra.mxu0 0.0
    %1255 = vmatprep.subr.mxu0 0.0
    %1256 = vmatpush1.msra.mxu0 0.0
    %1257 = vmatprep.subr.mxu0 0.0
    %1258 = vmatpush1.msra.mxu0 0.0
    %1259 = vmatprep.subr.mxu0 0.0
    %1260 = vmatpush1.msra.mxu0 0.0
    %1261 = vmatprep.subr.mxu0 0.0
    %1262 = vmatpush1.msra.mxu0 0.0
    %1263 = vmatprep.subr.mxu0 0.0
    %1264 = vmatpush1.msra.mxu0 0.0
    %1265 = vmatprep.subr.mxu0 0.0
    %1266 = vmatpush1.msra.mxu0 0.0
    %1267 = vmatprep.mubr.f32.mxu0 0.0
    %1268 = vmatmul.mubr.f32.gmra.mrb[0].mxu0 %v1201
    %v1269 = vpop.f32.mrb[0].mxu0
    %v1270 = vadd.f32 0.0, %v1269
    %v1271 = vpop.f32.mrb[0].mxu0
    %1272 = vdwg.mxu0
    %v1274 = vsel %vm722, %v833, 0
    %1276 = vmatprep.subr.mxu0 0.0
    %1277 = vmatpush1.msra.mxu0 %v95
    %1278 = vmatprep.subr.mxu0 0.0
    %1279 = vmatpush1.msra.mxu0 0.0
    %1280 = vmatprep.subr.mxu0 0.0
    %1281 = vmatpush1.msra.mxu0 0.0
    %1282 = vmatprep.subr.mxu0 0.0
    %1283 = vmatpush1.msra.mxu0 0.0
    %1284 = vmatprep.subr.mxu0 0.0
    %1285 = vmatpush1.msra.mxu0 0.0
    %1286 = vmatprep.subr.mxu0 0.0
    %1287 = vmatpush1.msra.mxu0 0.0
    %1288 = vmatprep.subr.mxu0 0.0
    %1289 = vmatpush1.msra.mxu0 0.0
    %1290 = vmatprep.subr.mxu0 0.0
    %1291 = vmatpush1.msra.mxu0 0.0
    %1292 = vmatprep.subr.mxu0 0.0
    %1293 = vmatpush1.msra.mxu0 0.0
    %1294 = vmatprep.subr.mxu0 0.0
    %1295 = vmatpush1.msra.mxu0 0.0
    %1296 = vmatprep.subr.mxu0 0.0
    %1297 = vmatpush1.msra.mxu0 0.0
    %1298 = vmatprep.subr.mxu0 0.0
    %1299 = vmatpush1.msra.mxu0 0.0
    %1300 = vmatprep.subr.mxu0 0.0
    %1301 = vmatpush1.msra.mxu0 0.0
    %1302 = vmatprep.subr.mxu0 0.0
    %1303 = vmatpush1.msra.mxu0 0.0
    %1304 = vmatprep.subr.mxu0 0.0
    %1305 = vmatpush1.msra.mxu0 0.0
    %1306 = vmatprep.subr.mxu0 0.0
    %1307 = vmatpush1.msra.mxu0 0.0
    %1308 = vmatprep.subr.mxu0 0.0
    %1309 = vmatpush1.msra.mxu0 0.0
    %1310 = vmatprep.subr.mxu0 0.0
    %1311 = vmatpush1.msra.mxu0 0.0
    %1312 = vmatprep.subr.mxu0 0.0
    %1313 = vmatpush1.msra.mxu0 0.0
    %1314 = vmatprep.subr.mxu0 0.0
    %1315 = vmatpush1.msra.mxu0 0.0
    %1316 = vmatprep.subr.mxu0 0.0
    %1317 = vmatpush1.msra.mxu0 0.0
    %1318 = vmatprep.subr.mxu0 0.0
    %1319 = vmatpush1.msra.mxu0 0.0
    %1320 = vmatprep.subr.mxu0 0.0
    %1321 = vmatpush1.msra.mxu0 0.0
    %1322 = vmatprep.subr.mxu0 0.0
    %1323 = vmatpush1.msra.mxu0 0.0
    %1324 = vmatprep.subr.mxu0 0.0
    %1325 = vmatpush1.msra.mxu0 0.0
    %1326 = vmatprep.subr.mxu0 0.0
    %1327 = vmatpush1.msra.mxu0 0.0
    %1328 = vmatprep.subr.mxu0 0.0
    %1329 = vmatpush1.msra.mxu0 0.0
    %1330 = vmatprep.subr.mxu0 0.0
    %1331 = vmatpush1.msra.mxu0 0.0
    %1332 = vmatprep.subr.mxu0 0.0
    %1333 = vmatpush1.msra.mxu0 0.0
    %1334 = vmatprep.subr.mxu0 0.0
    %1335 = vmatpush1.msra.mxu0 0.0
    %1336 = vmatprep.subr.mxu0 0.0
    %1337 = vmatpush1.msra.mxu0 0.0
    %1338 = vmatprep.subr.mxu0 0.0
    %1339 = vmatpush1.msra.mxu0 0.0
    %1340 = vmatprep.mubr.f32.mxu0 0.0
    %1341 = vmatmul.mubr.f32.gmra.mrb[0].mxu0 %v1274
    %v1342 = vpop.f32.mrb[0].mxu0
    %v1343 = vadd.f32 0.0, %v1342
    %v1344 = vpop.f32.mrb[0].mxu0
    %1345 = vdwg.mxu0
    %v1347 = vsel %vm722, %v834, 0
    %1349 = vmatprep.subr.mxu0 0.0
    %1350 = vmatpush1.msra.mxu0 %v96
    %1351 = vmatprep.subr.mxu0 0.0
    %1352 = vmatpush1.msra.mxu0 0.0
    %1353 = vmatprep.subr.mxu0 0.0
    %1354 = vmatpush1.msra.mxu0 0.0
    %1355 = vmatprep.subr.mxu0 0.0
    %1356 = vmatpush1.msra.mxu0 0.0
    %1357 = vmatprep.subr.mxu0 0.0
    %1358 = vmatpush1.msra.mxu0 0.0
    %1359 = vmatprep.subr.mxu0 0.0
    %1360 = vmatpush1.msra.mxu0 0.0
    %1361 = vmatprep.subr.mxu0 0.0
    %1362 = vmatpush1.msra.mxu0 0.0
    %1363 = vmatprep.subr.mxu0 0.0
    %1364 = vmatpush1.msra.mxu0 0.0
    %1365 = vmatprep.subr.mxu0 0.0
    %1366 = vmatpush1.msra.mxu0 0.0
    %1367 = vmatprep.subr.mxu0 0.0
    %1368 = vmatpush1.msra.mxu0 0.0
    %1369 = vmatprep.subr.mxu0 0.0
    %1370 = vmatpush1.msra.mxu0 0.0
    %1371 = vmatprep.subr.mxu0 0.0
    %1372 = vmatpush1.msra.mxu0 0.0
    %1373 = vmatprep.subr.mxu0 0.0
    %1374 = vmatpush1.msra.mxu0 0.0
    %1375 = vmatprep.subr.mxu0 0.0
    %1376 = vmatpush1.msra.mxu0 0.0
    %1377 = vmatprep.subr.mxu0 0.0
    %1378 = vmatpush1.msra.mxu0 0.0
    %1379 = vmatprep.subr.mxu0 0.0
    %1380 = vmatpush1.msra.mxu0 0.0
    %1381 = vmatprep.subr.mxu0 0.0
    %1382 = vmatpush1.msra.mxu0 0.0
    %1383 = vmatprep.subr.mxu0 0.0
    %1384 = vmatpush1.msra.mxu0 0.0
    %1385 = vmatprep.subr.mxu0 0.0
    %1386 = vmatpush1.msra.mxu0 0.0
    %1387 = vmatprep.subr.mxu0 0.0
    %1388 = vmatpush1.msra.mxu0 0.0
    %1389 = vmatprep.subr.mxu0 0.0
    %1390 = vmatpush1.msra.mxu0 0.0
    %1391 = vmatprep.subr.mxu0 0.0
    %1392 = vmatpush1.msra.mxu0 0.0
    %1393 = vmatprep.subr.mxu0 0.0
    %1394 = vmatpush1.msra.mxu0 0.0
    %1395 = vmatprep.subr.mxu0 0.0
    %1396 = vmatpush1.msra.mxu0 0.0
    %1397 = vmatprep.subr.mxu0 0.0
    %1398 = vmatpush1.msra.mxu0 0.0
    %1399 = vmatprep.subr.mxu0 0.0
    %1400 = vmatpush1.msra.mxu0 0.0
    %1401 = vmatprep.subr.mxu0 0.0
    %1402 = vmatpush1.msra.mxu0 0.0
    %1403 = vmatprep.subr.mxu0 0.0
    %1404 = vmatpush1.msra.mxu0 0.0
    %1405 = vmatprep.subr.mxu0 0.0
    %1406 = vmatpush1.msra.mxu0 0.0
    %1407 = vmatprep.subr.mxu0 0.0
    %1408 = vmatpush1.msra.mxu0 0.0
    %1409 = vmatprep.subr.mxu0 0.0
    %1410 = vmatpush1.msra.mxu0 0.0
    %1411 = vmatprep.subr.mxu0 0.0
    %1412 = vmatpush1.msra.mxu0 0.0
    %1413 = vmatprep.mubr.f32.mxu0 0.0
    %1414 = vmatmul.mubr.f32.gmra.mrb[0].mxu0 %v1347
    %v1415 = vpop.f32.mrb[0].mxu0
    %v1416 = vadd.f32 0.0, %v1415
    %v1417 = vpop.f32.mrb[0].mxu0
    %1418 = vdwg.mxu0
    %v1419 = vcombine.low %v905, %v1051
    %v1420 = vcombine.high %v905, %v1051
    %v1422 = vunpack.c.l.s4 1983009808
    %v1423 = vunpack.c.0.s8 %v1422
    %v1424 = vlaneseq
    %v1425 = vshrl.u32 %v1424, 7
    %v1426 = vsub.s32 %v1423, %v1425
    %v1427 = vrot.slane %v1419, %v1426
    %v1429 = vunpack.c.l.s4 1983009808
    %v1430 = vunpack.c.0.s8 %v1429
    %v1431 = vlaneseq
    %v1432 = vshrl.u32 %v1431, 7
    %v1433 = vsub.s32 %v1430, %v1432
    %v1434 = vrot.slane %v1420, %v1433
    %v1435 = vcombine.low %v978, %v1124
    %v1436 = vcombine.high %v978, %v1124
    %v1438 = vunpack.c.l.s4 1983009808
    %v1439 = vunpack.c.0.s8 %v1438
    %v1440 = vlaneseq
    %v1441 = vshrl.u32 %v1440, 7
    %v1442 = vsub.s32 %v1439, %v1441
    %v1443 = vrot.slane %v1435, %v1442
    %v1445 = vunpack.c.l.s4 1983009808
    %v1446 = vunpack.c.0.s8 %v1445
    %v1447 = vlaneseq
    %v1448 = vshrl.u32 %v1447, 7
    %v1449 = vsub.s32 %v1446, %v1448
    %v1450 = vrot.slane %v1436, %v1449
    %v1451 = vcombine.low %v1197, %v1343
    %v1452 = vcombine.high %v1197, %v1343
    %v1454 = vunpack.c.l.s4 1983009808
    %v1455 = vunpack.c.0.s8 %v1454
    %v1456 = vlaneseq
    %v1457 = vshrl.u32 %v1456, 7
    %v1458 = vsub.s32 %v1455, %v1457
    %v1459 = vrot.slane %v1451, %v1458
    %v1461 = vunpack.c.l.s4 1983009808
    %v1462 = vunpack.c.0.s8 %v1461
    %v1463 = vlaneseq
    %v1464 = vshrl.u32 %v1463, 7
    %v1465 = vsub.s32 %v1462, %v1464
    %v1466 = vrot.slane %v1452, %v1465
    %v1467 = vcombine.low %v1270, %v1416
    %v1468 = vcombine.high %v1270, %v1416
    %v1470 = vunpack.c.l.s4 1983009808
    %v1471 = vunpack.c.0.s8 %v1470
    %v1472 = vlaneseq
    %v1473 = vshrl.u32 %v1472, 7
    %v1474 = vsub.s32 %v1471, %v1473
    %v1475 = vrot.slane %v1467, %v1474
    %v1477 = vunpack.c.l.s4 1983009808
    %v1478 = vunpack.c.0.s8 %v1477
    %v1479 = vlaneseq
    %v1480 = vshrl.u32 %v1479, 7
    %v1481 = vsub.s32 %v1478, %v1480
    %v1482 = vrot.slane %v1468, %v1481
    %v1483 = vcombine.low %v1427, %v1443
    %v1484 = vcombine.high %v1427, %v1443
    %v1486 = vunpack.c.l.s4 1934713408
    %v1487 = vunpack.c.0.s8 %v1486
    %v1488 = vlaneseq
    %v1489 = vshrl.u32 %v1488, 7
    %v1490 = vsub.s32 %v1487, %v1489
    %v1491 = vrot.slane %v1483, %v1490
    %v1493 = vunpack.c.l.s4 1934713408
    %v1494 = vunpack.c.0.s8 %v1493
    %v1495 = vlaneseq
    %v1496 = vshrl.u32 %v1495, 7
    %v1497 = vsub.s32 %v1494, %v1496
    %v1498 = vrot.slane %v1484, %v1497
    %v1499 = vcombine.low %v1434, %v1450
    %v1500 = vcombine.high %v1434, %v1450
    %v1502 = vunpack.c.l.s4 1934713408
    %v1503 = vunpack.c.0.s8 %v1502
    %v1504 = vlaneseq
    %v1505 = vshrl.u32 %v1504, 7
    %v1506 = vsub.s32 %v1503, %v1505
    %v1507 = vrot.slane %v1499, %v1506
    %v1509 = vunpack.c.l.s4 1934713408
    %v1510 = vunpack.c.0.s8 %v1509
    %v1511 = vlaneseq
    %v1512 = vshrl.u32 %v1511, 7
    %v1513 = vsub.s32 %v1510, %v1512
    %v1514 = vrot.slane %v1500, %v1513
    %v1515 = vcombine.low %v1459, %v1475
    %v1516 = vcombine.high %v1459, %v1475
    %v1518 = vunpack.c.l.s4 1934713408
    %v1519 = vunpack.c.0.s8 %v1518
    %v1520 = vlaneseq
    %v1521 = vshrl.u32 %v1520, 7
    %v1522 = vsub.s32 %v1519, %v1521
    %v1523 = vrot.slane %v1515, %v1522
    %v1525 = vunpack.c.l.s4 1934713408
    %v1526 = vunpack.c.0.s8 %v1525
    %v1527 = vlaneseq
    %v1528 = vshrl.u32 %v1527, 7
    %v1529 = vsub.s32 %v1526, %v1528
    %v1530 = vrot.slane %v1516, %v1529
    %v1531 = vcombine.low %v1466, %v1482
    %v1532 = vcombine.high %v1466, %v1482
    %v1534 = vunpack.c.l.s4 1934713408
    %v1535 = vunpack.c.0.s8 %v1534
    %v1536 = vlaneseq
    %v1537 = vshrl.u32 %v1536, 7
    %v1538 = vsub.s32 %v1535, %v1537
    %v1539 = vrot.slane %v1531, %v1538
    %v1541 = vunpack.c.l.s4 1934713408
    %v1542 = vunpack.c.0.s8 %v1541
    %v1543 = vlaneseq
    %v1544 = vshrl.u32 %v1543, 7
    %v1545 = vsub.s32 %v1542, %v1544
    %v1546 = vrot.slane %v1532, %v1545
    %v1547 = vcombine.low %v1491, %v1523
    %v1548 = vcombine.high %v1491, %v1523
    %v1549 = vcombine.low %v1498, %v1530
    %v1550 = vcombine.high %v1498, %v1530
    %v1551 = vcombine.low %v1507, %v1539
    %v1552 = vcombine.high %v1507, %v1539
    %v1553 = vcombine.low %v1514, %v1546
    %v1554 = vcombine.high %v1514, %v1546
    %1556 = vrot.lane.b32.xlu0 %v1548, 32
    %v1557 = vpop.permute.xlu0 %1556
    %1560 = vrot.lane.b32.xlu0 %v1549, 64
    %v1561 = vpop.permute.xlu0 %1560
    %1564 = vrot.lane.b32.xlu0 %v1550, 96
    %v1565 = vpop.permute.xlu0 %1564
    %1568 = vrot.lane.b32.xlu0 %v1552, 32
    %v1569 = vpop.permute.xlu0 %1568
    %1572 = vrot.lane.b32.xlu0 %v1553, 64
    %v1573 = vpop.permute.xlu0 %1572
    %1576 = vrot.lane.b32.xlu0 %v1554, 96
    %v1577 = vpop.permute.xlu0 %1576
    %v1579 = vsel %vm105, %v1547, %v1557
    %vm1580 = vcmask 523264
    %v1581 = vsel %vm1580, %v1579, %v1561
    %vm1582 = vcmask 785408
    %v1583 = vsel %vm1582, %v1581, %v1565
    %v1584 = vsel %vm105, %v1551, %v1569
    %v1585 = vsel %vm1580, %v1584, %v1573
    %v1586 = vsel %vm1582, %v1585, %v1577
    %1587 = vst [vmem:[#allocation10] sm:$0xff] %v1583
    %1588 = vst [vmem:[#allocation10 + $0x8] sm:$0xff] %v1586
    // Predicated region
    $region34: #{tpu_custom_call.1} parent=1 // pred_check
      _
    $region35: #{tpu_custom_call.1} parent=1 // pred_check_branch
      %1590 = sbr.rel (0) target = $region37
    $region36: #{tpu_custom_call.1} parent=1 // pred_region
      %s1592 = ssub.s32 256, 256
      %1593 = vsyncadd [#allocation4], %s1592
      %s1595 = sshll.u32 [#allocation10], 4
      %s1596 = int_to_ptr.vmem [resolvable:$true] %s1595
      %1598 = dma.vmem_to_hbm [thread:$0]  %s1596, 256, %s4, [#allocation4]
    $region37: #{tpu_custom_call.1} parent=1 // pred_fallthru
      _
    // Predicated region
    $region38: #{tpu_custom_call.1} parent=1 // pred_check
      _
    $region39: #{tpu_custom_call.1} parent=1 // pred_check_branch
      %1600 = sbr.rel (0) target = $region41
    $region40: #{tpu_custom_call.1} parent=1 // pred_region
      %1601 = dma.done [#allocation4], 256
    $region41: #{tpu_custom_call.1} parent=1 // pred_fallthru
      _
    %1602 = vsyncpa [#allocation3], 1
    %1603 = vsyncpa [#allocation6], 1
    %1604 = vsyncpa [#allocation9], 1
    %1605 = vsyncpa [#allocation4], 1

</llo_original>
